<compile_context>
chip_gen: v6e
topology: v6e:2x2x1
jax: 0.10.0
libtpu: 0.0.40
codegen_flags: <defaults>
</compile_context>

<pallas_src>
import functools

import jax
import jax.numpy as jnp
import numpy as np
from jax.experimental import pallas as pl
from jax.experimental.pallas import tpu as pltpu

INPUT_DIM = 4
HIDDEN_DIMS = [64, 64, 32]
OUTPUT_DIM = 1
NUM_PHYSICS_LAWS = 10   # len(PhysicsLaw); constraint_weights is unused in forward()
MAX_TILE_B = 8192       # rows / grid step (few MiB of f32 activations per tile)

_HIGHEST = jax.lax.Precision.HIGHEST


def _round_up(n, m):
    return ((n + m - 1) // m) * m


def _choose_tiling(batch):
    """Pick (tile_b, num_tiles, padded_batch) minimizing padding.

    For batch > 128, force an even tile count >= 2 so the "parallel" grid axis
    shards across both TensorCores on v7x (harmless on single-TC chips).
    """
    num_tiles = max(1, -(-batch // MAX_TILE_B))
    if batch > 128:
        num_tiles = max(num_tiles, 2)
        num_tiles += num_tiles % 2
    tile_b = _round_up(-(-batch // num_tiles), 128)
    return tile_b, num_tiles, tile_b * num_tiles


def _pinn_kernel(xt_ref,
                 w0_ref, b0_ref, w1_ref, b1_ref, w2_ref, b2_ref, w3_ref, b3_ref,
                 out_ref, part_ref, *, batch, tile_b):
    """One batch tile, computed with batch on the lane axis.

    xt_ref  : (INPUT_DIM, TILE_B)   input tile (pre-transposed in the wrapper)
    w0..w2  : (out, in) PyTorch Linear layout ; w3_ref : (32, 1) for VPU path
    b*_ref  : (out, 1)
    out_ref : (OUTPUT_DIM, TILE_B)  lane-dense output tile
    part_ref: (1, 128) per-tile partial sums [finite, causal, |diff|, ...]
    """
    xt = xt_ref[...]                                            # (4, T) f32

    # --- layer 0: K=4 contraction on the VPU (too shallow to be worth the MXU)
    w0 = w0_ref[...]                                            # (64, 4)
    h = b0_ref[...]                                             # (64, 1)
    for k in range(INPUT_DIM):
        h = h + w0[:, k:k + 1] * xt[k:k + 1, :]                 # (64, T)
    h = jnp.tanh(h)

    # --- layers 1..2 on the MXU; explicit f32 precision (accumulator alone
    #     doesn't guarantee f32 multiplies) ---
    h = jnp.tanh(jnp.dot(w1_ref[...], h,
                         preferred_element_type=jnp.float32,
                         precision=_HIGHEST) + b1_ref[...])     # (64, T)
    h = jnp.tanh(jnp.dot(w2_ref[...], h,
                         preferred_element_type=jnp.float32,
                         precision=_HIGHEST) + b2_ref[...])     # (32, T)

    # --- output layer (M=1): skip the MXU -- VPU multiply + sublane reduce ---
    y = jnp.sum(w3_ref[...] * h, axis=0, keepdims=True) + b3_ref[...]   # (1, T)

    out_ref[...] = y                                            # lane-dense store

    # --- per-tile partial metric sums (final reduction happens in the wrapper)
    col = jax.lax.broadcasted_iota(jnp.int32, (1, tile_b), 1)
    gcol = pl.program_id(0) * tile_b + col                      # global row id
    valid = (gcol < batch).astype(jnp.float32)                  # mask padded rows

    finite = jnp.logical_and(y == y, jnp.abs(y) < jnp.inf)      # isfinite(y)
    finite_sum = jnp.sum(finite.astype(jnp.float32) * valid)
    causal_sum = jnp.sum((xt[0:1, :] >= 0.0).astype(jnp.float32) * valid)

    # Smoothness diffs via an XLU lane rotate instead of unaligned slices:
    # y_next[j] = y[j + 1 mod T]; mask the wrap lane and rows past the batch.
    y_next = pltpu.roll(y, shift=tile_b - 1, axis=1)
    pair_valid = jnp.logical_and(col < (tile_b - 1),
                                 (gcol + 1) < batch).astype(jnp.float32)
    diff_sum = jnp.sum(jnp.abs(y_next - y) * pair_valid)

    lane = jax.lax.broadcasted_iota(jnp.int32, (1, 128), 1)
    part_ref[...] = ((lane == 0).astype(jnp.float32) * finite_sum
                     + (lane == 1).astype(jnp.float32) * causal_sum
                     + (lane == 2).astype(jnp.float32) * diff_sum)
    # TODO(synk): energy_conservation metric only exists when output_dim >= 3;
    # default output_dim == 1 so the reference module never computes it.


def init_params(key):
    """PyTorch-Linear-style init: U(-1/sqrt(fan_in), 1/sqrt(fan_in)); w stored (in, out)."""
    dims = [INPUT_DIM] + HIDDEN_DIMS + [OUTPUT_DIM]
    params = []
    for i in range(len(dims) - 1):
        key, wk, bk = jax.random.split(key, 3)
        bound = 1.0 / float(np.sqrt(dims[i]))
        w = jax.random.uniform(wk, (dims[i], dims[i + 1]), jnp.float32, -bound, bound)
        b = jax.random.uniform(bk, (dims[i + 1],), jnp.float32, -bound, bound)
        params.append((w, b))
    return params


def pinn_forward(x, params):
    """Wrapper: pads/transposes x, runs the tiled kernel, reduces metrics."""
    B = x.shape[0]
    assert x.shape[1] == INPUT_DIM

    tile_b, num_tiles, b_pad = _choose_tiling(B)

    # Layout plumbing (outside the kernel): put batch on the lane axis.
    xt = jnp.pad(x.astype(jnp.float32).T, ((0, 0), (0, b_pad - B)))   # (4, B_pad)

    (w0, b0), (w1, b1), (w2, b2), (w3, b3) = params
    flat = [
        w0.T, b0.reshape(-1, 1),                                  # (64,4), (64,1)
        w1.T, b1.reshape(-1, 1),                                  # (64,64), (64,1)
        w2.T, b2.reshape(-1, 1),                                  # (32,64), (32,1)
        w3.reshape(HIDDEN_DIMS[-1], OUTPUT_DIM),                  # (32,1) -- VPU path
        b3.reshape(-1, 1),                                        # (1,1)
    ]

    # Constant index_map: parameters are DMA'd once and stay VMEM-resident.
    param_specs = [pl.BlockSpec(p.shape, lambda i: (0, 0)) for p in flat]

    flops = 2 * B * sum(a * c for a, c in zip([INPUT_DIM] + HIDDEN_DIMS,
                                              HIDDEN_DIMS + [OUTPUT_DIM]))
    bytes_accessed = B * 4 * (INPUT_DIM + OUTPUT_DIM) + sum(int(p.size) * 4 for p in flat)

    out_t, part = pl.pallas_call(
        functools.partial(_pinn_kernel, batch=B, tile_b=tile_b),
        grid_spec=pltpu.PrefetchScalarGridSpec(
            num_scalar_prefetch=0,
            grid=(num_tiles,),
            in_specs=[pl.BlockSpec((INPUT_DIM, tile_b), lambda i: (0, i))] + param_specs,
            out_specs=(
                pl.BlockSpec((OUTPUT_DIM, tile_b), lambda i: (0, i)),     # lane-dense out
                pl.BlockSpec((None, 1, 128), lambda i: (i, 0, 0)),        # per-tile partials
            ),
        ),
        out_shape=(
            jax.ShapeDtypeStruct((OUTPUT_DIM, b_pad), jnp.float32),
            jax.ShapeDtypeStruct((num_tiles, 1, 128), jnp.float32),
        ),
        compiler_params=pltpu.CompilerParams(
            dimension_semantics=("parallel",),
            vmem_limit_bytes=32 * 1024 * 1024,
        ),
        cost_estimate=pl.CostEstimate(flops=int(flops),
                                      transcendentals=int(B * sum(HIDDEN_DIMS)),
                                      bytes_accessed=int(bytes_accessed)),
    )(xt, *flat)

    out = out_t.T[:B]                                           # (B, OUTPUT_DIM)

    finite_total = jnp.sum(part[:, 0, 0])
    causal_total = jnp.sum(part[:, 0, 1])
    diff_total = jnp.sum(part[:, 0, 2])
    if num_tiles > 1:
        # Cross-tile boundary diffs (last row of tile t-1 vs first row of tile t).
        b_idx = np.arange(tile_b, b_pad, tile_b)
        b_idx = b_idx[b_idx < B]
        if b_idx.size:
            diff_total = diff_total + jnp.sum(jnp.abs(out[b_idx] - out[b_idx - 1]))

    metrics = {
        "continuity": finite_total / float(B * OUTPUT_DIM),
        "causality": causal_total / float(B),
    }
    if B > 1:
        metrics["smoothness"] = 1.0 / (1.0 + diff_total / float((B - 1) * OUTPUT_DIM))
    return out, metrics


def reference_forward(x, params):
    """Pure-JAX reference mirroring the PyTorch forward (f32-precision dots)."""
    h = x
    for i, (w, b) in enumerate(params):
        h = jnp.dot(h, w, precision=_HIGHEST) + b
        if i < len(params) - 1:
            h = jnp.tanh(h)
    metrics = {
        "continuity": jnp.mean(jnp.isfinite(h).astype(jnp.float32)),
        "causality": jnp.mean((x[:, 0] >= 0).astype(jnp.float32)),
    }
    if x.shape[0] > 1:
        metrics["smoothness"] = 1.0 / (1.0 + jnp.mean(jnp.abs(jnp.diff(h, axis=0))))
    return h, metrics


def _check(B, xk, params):
    x = jax.random.normal(xk, (B, INPUT_DIM), dtype=jnp.float32)
    out, metrics = pinn_forward(x, params)
    out = jax.block_until_ready(out)
    metrics = jax.tree_util.tree_map(jax.block_until_ready, metrics)

    ref_out, ref_metrics = reference_forward(x, params)
    np.testing.assert_allclose(np.asarray(out), np.asarray(ref_out), rtol=1e-5, atol=1e-5)
    for k in ref_metrics:
        np.testing.assert_allclose(np.asarray(metrics[k]), np.asarray(ref_metrics[k]),
                                   rtol=1e-5, atol=1e-5)


if __name__ == "__main__":
    key = jax.random.PRNGKey(0)
    key, xk_small, xk_multi, pk = jax.random.split(key, 4)
    params = init_params(pk)

    _check(8, xk_small, params)       # small single-tile case
    _check(2500, xk_multi, params)    # 2 tiles of 1280 + padding + boundary-diff path

    print("KERNEL_OK")
</pallas_src>

<mosaic_0001>
module attributes {stable_mosaic.version = 11 : i64} {
  func.func @_pinn_kernel(%arg0: i32, %arg1: memref<4x128xf32, #tpu.memory_space<vmem>>, %arg2: memref<64x4xf32, #tpu.memory_space<vmem>>, %arg3: memref<64x1xf32, #tpu.memory_space<vmem>>, %arg4: memref<64x64xf32, #tpu.memory_space<vmem>>, %arg5: memref<64x1xf32, #tpu.memory_space<vmem>>, %arg6: memref<32x64xf32, #tpu.memory_space<vmem>>, %arg7: memref<32x1xf32, #tpu.memory_space<vmem>>, %arg8: memref<32x1xf32, #tpu.memory_space<vmem>>, %arg9: memref<1x1xf32, #tpu.memory_space<vmem>>, %arg10: memref<1x128xf32, #tpu.memory_space<vmem>>, %arg11: memref<1x1x128xf32, #tpu.memory_space<vmem>>) attributes {dimension_semantics = [#tpu.dimension_semantics<parallel>], iteration_bounds = array<i64: 1>, scalar_prefetch = 0 : i64, scratch_operands = 0 : i64, tpu.core_type = #tpu.core_type<tc>, window_params = [{transform_indices = @transform_0, window_bounds = array<i64: 4, 128>}, {pipeline_mode = #tpu.pipeline_mode<synchronous>, transform_indices = @transform_1, window_bounds = array<i64: 64, 4>}, {pipeline_mode = #tpu.pipeline_mode<synchronous>, transform_indices = @transform_2, window_bounds = array<i64: 64, 1>}, {pipeline_mode = #tpu.pipeline_mode<synchronous>, transform_indices = @transform_3, window_bounds = array<i64: 64, 64>}, {pipeline_mode = #tpu.pipeline_mode<synchronous>, transform_indices = @transform_4, window_bounds = array<i64: 64, 1>}, {pipeline_mode = #tpu.pipeline_mode<synchronous>, transform_indices = @transform_5, window_bounds = array<i64: 32, 64>}, {pipeline_mode = #tpu.pipeline_mode<synchronous>, transform_indices = @transform_6, window_bounds = array<i64: 32, 1>}, {pipeline_mode = #tpu.pipeline_mode<synchronous>, transform_indices = @transform_7, window_bounds = array<i64: 32, 1>}, {pipeline_mode = #tpu.pipeline_mode<synchronous>, transform_indices = @transform_8, window_bounds = array<i64: 1, 1>}, {transform_indices = @transform_9, window_bounds = array<i64: 1, 128>}, {transform_indices = @transform_10, window_bounds = array<i64: 1, 1, 128>}]} {
    %c0 = arith.constant 0 : index
    %c0_0 = arith.constant 0 : index
    %0 = vector.load %arg1[%c0, %c0_0] : memref<4x128xf32, #tpu.memory_space<vmem>>, vector<4x128xf32>
    %c0_1 = arith.constant 0 : index
    %c0_2 = arith.constant 0 : index
    %1 = vector.load %arg2[%c0_1, %c0_2] : memref<64x4xf32, #tpu.memory_space<vmem>>, vector<64x4xf32>
    %c0_3 = arith.constant 0 : index
    %c0_4 = arith.constant 0 : index
    %2 = vector.load %arg3[%c0_3, %c0_4] : memref<64x1xf32, #tpu.memory_space<vmem>>, vector<64x1xf32>
    %3 = vector.extract_strided_slice %1 {offsets = [0, 0], sizes = [64, 1], strides = [1, 1]} : vector<64x4xf32> to vector<64x1xf32>
    %4 = vector.extract_strided_slice %0 {offsets = [0, 0], sizes = [1, 128], strides = [1, 1]} : vector<4x128xf32> to vector<1x128xf32>
    %5 = vector.broadcast %3 : vector<64x1xf32> to vector<64x128xf32>
    %6 = vector.broadcast %4 : vector<1x128xf32> to vector<64x128xf32>
    %7 = arith.mulf %5, %6 : vector<64x128xf32>
    %8 = vector.broadcast %2 : vector<64x1xf32> to vector<64x128xf32>
    %9 = arith.addf %8, %7 : vector<64x128xf32>
    %10 = vector.extract_strided_slice %1 {offsets = [0, 1], sizes = [64, 1], strides = [1, 1]} : vector<64x4xf32> to vector<64x1xf32>
    %11 = vector.extract_strided_slice %0 {offsets = [1, 0], sizes = [1, 128], strides = [1, 1]} : vector<4x128xf32> to vector<1x128xf32>
    %12 = vector.broadcast %10 : vector<64x1xf32> to vector<64x128xf32>
    %13 = vector.broadcast %11 : vector<1x128xf32> to vector<64x128xf32>
    %14 = arith.mulf %12, %13 : vector<64x128xf32>
    %15 = arith.addf %9, %14 : vector<64x128xf32>
    %16 = vector.extract_strided_slice %1 {offsets = [0, 2], sizes = [64, 1], strides = [1, 1]} : vector<64x4xf32> to vector<64x1xf32>
    %17 = vector.extract_strided_slice %0 {offsets = [2, 0], sizes = [1, 128], strides = [1, 1]} : vector<4x128xf32> to vector<1x128xf32>
    %18 = vector.broadcast %16 : vector<64x1xf32> to vector<64x128xf32>
    %19 = vector.broadcast %17 : vector<1x128xf32> to vector<64x128xf32>
    %20 = arith.mulf %18, %19 : vector<64x128xf32>
    %21 = arith.addf %15, %20 : vector<64x128xf32>
    %22 = vector.extract_strided_slice %1 {offsets = [0, 3], sizes = [64, 1], strides = [1, 1]} : vector<64x4xf32> to vector<64x1xf32>
    %23 = vector.extract_strided_slice %0 {offsets = [3, 0], sizes = [1, 128], strides = [1, 1]} : vector<4x128xf32> to vector<1x128xf32>
    %24 = vector.broadcast %22 : vector<64x1xf32> to vector<64x128xf32>
    %25 = vector.broadcast %23 : vector<1x128xf32> to vector<64x128xf32>
    %26 = arith.mulf %24, %25 : vector<64x128xf32>
    %27 = arith.addf %21, %26 : vector<64x128xf32>
    %28 = math.tanh %27 : vector<64x128xf32>
    %c0_5 = arith.constant 0 : index
    %c0_6 = arith.constant 0 : index
    %29 = vector.load %arg4[%c0_5, %c0_6] : memref<64x64xf32, #tpu.memory_space<vmem>>, vector<64x64xf32>
    %cst = arith.constant dense<0.000000e+00> : vector<64x128xf32>
    %30 = tpu.matmul %29, %28, %cst {dimension_numbers = #tpu.dot_dimension_numbers<[1], [0], [0], [1], [0, 0, 1, 1], [], []>, precision = #tpu.contract_precision<fp32>} : vector<64x64xf32>, vector<64x128xf32>, vector<64x128xf32> -> vector<64x128xf32>
    %c0_7 = arith.constant 0 : index
    %c0_8 = arith.constant 0 : index
    %31 = vector.load %arg5[%c0_7, %c0_8] : memref<64x1xf32, #tpu.memory_space<vmem>>, vector<64x1xf32>
    %32 = vector.broadcast %31 : vector<64x1xf32> to vector<64x128xf32>
    %33 = arith.addf %30, %32 : vector<64x128xf32>
    %34 = math.tanh %33 : vector<64x128xf32>
    %c0_9 = arith.constant 0 : index
    %c0_10 = arith.constant 0 : index
    %35 = vector.load %arg6[%c0_9, %c0_10] : memref<32x64xf32, #tpu.memory_space<vmem>>, vector<32x64xf32>
    %cst_11 = arith.constant dense<0.000000e+00> : vector<32x128xf32>
    %36 = tpu.matmul %35, %34, %cst_11 {dimension_numbers = #tpu.dot_dimension_numbers<[1], [0], [0], [1], [0, 0, 1, 1], [], []>, precision = #tpu.contract_precision<fp32>} : vector<32x64xf32>, vector<64x128xf32>, vector<32x128xf32> -> vector<32x128xf32>
    %c0_12 = arith.constant 0 : index
    %c0_13 = arith.constant 0 : index
    %37 = vector.load %arg7[%c0_12, %c0_13] : memref<32x1xf32, #tpu.memory_space<vmem>>, vector<32x1xf32>
    %38 = vector.broadcast %37 : vector<32x1xf32> to vector<32x128xf32>
    %39 = arith.addf %36, %38 : vector<32x128xf32>
    %40 = math.tanh %39 : vector<32x128xf32>
    %c0_14 = arith.constant 0 : index
    %c0_15 = arith.constant 0 : index
    %41 = vector.load %arg8[%c0_14, %c0_15] : memref<32x1xf32, #tpu.memory_space<vmem>>, vector<32x1xf32>
    %42 = vector.broadcast %41 : vector<32x1xf32> to vector<32x128xf32>
    %43 = arith.mulf %42, %40 : vector<32x128xf32>
    %cst_16 = arith.constant dense<0.000000e+00> : vector<128xf32>
    %44 = vector.multi_reduction <add>, %43, %cst_16 [0] : vector<32x128xf32> to vector<128xf32>
    %45 = vector.shape_cast %44 : vector<128xf32> to vector<1x128xf32>
    %c0_17 = arith.constant 0 : index
    %c0_18 = arith.constant 0 : index
    %46 = vector.load %arg9[%c0_17, %c0_18] : memref<1x1xf32, #tpu.memory_space<vmem>>, vector<1x1xf32>
    %47 = vector.broadcast %46 : vector<1x1xf32> to vector<1x128xf32>
    %48 = arith.addf %45, %47 : vector<1x128xf32>
    %c0_19 = arith.constant 0 : index
    %c0_20 = arith.constant 0 : index
    %49 = vector.load %arg10[%c0_19, %c0_20] : memref<1x128xf32, #tpu.memory_space<vmem>>, vector<1x128xf32>
    tpu.vector_store %arg10[%c0_19, %c0_20], %48 {strides = array<i32>} : memref<1x128xf32, #tpu.memory_space<vmem>>, vector<1x128xf32>,
    %50 = tpu.iota {dimensions = array<i32: 1>} : vector<1x128xi32>
    %c128_i32 = arith.constant 128 : i32
    %51 = arith.muli %arg0, %c128_i32 : i32
    %52 = vector.broadcast %51 : i32 to vector<1x128xi32>
    %53 = arith.addi %52, %50 : vector<1x128xi32>
    %c8_i32 = arith.constant 8 : i32
    %54 = vector.broadcast %c8_i32 : i32 to vector<1x128xi32>
    %55 = arith.cmpi slt, %53, %54 : vector<1x128xi32>
    %56 = arith.extui %55 : vector<1x128xi1> to vector<1x128xi32>
    %57 = arith.sitofp %56 : vector<1x128xi32> to vector<1x128xf32>
    %58 = arith.cmpf oeq, %48, %48 : vector<1x128xf32>
    %59 = math.absf %48 : vector<1x128xf32>
    %cst_21 = arith.constant 0x7F800000 : f32
    %60 = vector.broadcast %cst_21 : f32 to vector<1x128xf32>
    %61 = arith.cmpf olt, %59, %60 : vector<1x128xf32>
    %62 = arith.andi %58, %61 : vector<1x128xi1>
    %63 = arith.extui %62 : vector<1x128xi1> to vector<1x128xi32>
    %64 = arith.sitofp %63 : vector<1x128xi32> to vector<1x128xf32>
    %65 = arith.mulf %64, %57 : vector<1x128xf32>
    %66 = vector.shape_cast %65 : vector<1x128xf32> to vector<1x1x128xf32>
    %cst_22 = arith.constant dense<0.000000e+00> : vector<1xf32>
    %67 = vector.multi_reduction <add>, %66, %cst_22 [1, 2] : vector<1x1x128xf32> to vector<1xf32>
    %68 = vector.shape_cast %67 : vector<1xf32> to vector<1x1x1xf32>
    %69 = vector.extract %68[0, 0, 0] : f32 from vector<1x1x1xf32>
    %70 = vector.extract_strided_slice %0 {offsets = [0, 0], sizes = [1, 128], strides = [1, 1]} : vector<4x128xf32> to vector<1x128xf32>
    %cst_23 = arith.constant 0.000000e+00 : f32
    %71 = vector.broadcast %cst_23 : f32 to vector<1x128xf32>
    %72 = arith.cmpf oge, %70, %71 : vector<1x128xf32>
    %73 = arith.extui %72 : vector<1x128xi1> to vector<1x128xi32>
    %74 = arith.sitofp %73 : vector<1x128xi32> to vector<1x128xf32>
    %75 = arith.mulf %74, %57 : vector<1x128xf32>
    %76 = vector.shape_cast %75 : vector<1x128xf32> to vector<1x1x128xf32>
    %cst_24 = arith.constant dense<0.000000e+00> : vector<1xf32>
    %77 = vector.multi_reduction <add>, %76, %cst_24 [1, 2] : vector<1x1x128xf32> to vector<1xf32>
    %78 = vector.shape_cast %77 : vector<1xf32> to vector<1x1x1xf32>
    %79 = vector.extract %78[0, 0, 0] : f32 from vector<1x1x1xf32>
    %c127_i32 = arith.constant 127 : i32
    %80 = tpu.dynamic_rotate %48 by %c127_i32 dim 1 : vector<1x128xf32>, i32 -> vector<1x128xf32>
    %c127_i32_25 = arith.constant 127 : i32
    %81 = vector.broadcast %c127_i32_25 : i32 to vector<1x128xi32>
    %82 = arith.cmpi slt, %50, %81 : vector<1x128xi32>
    %c1_i32 = arith.constant 1 : i32
    %83 = vector.broadcast %c1_i32 : i32 to vector<1x128xi32>
    %84 = arith.addi %53, %83 : vector<1x128xi32>
    %c8_i32_26 = arith.constant 8 : i32
    %85 = vector.broadcast %c8_i32_26 : i32 to vector<1x128xi32>
    %86 = arith.cmpi slt, %84, %85 : vector<1x128xi32>
    %87 = arith.andi %82, %86 : vector<1x128xi1>
    %88 = arith.extui %87 : vector<1x128xi1> to vector<1x128xi32>
    %89 = arith.sitofp %88 : vector<1x128xi32> to vector<1x128xf32>
    %90 = arith.subf %80, %48 : vector<1x128xf32>
    %91 = math.absf %90 : vector<1x128xf32>
    %92 = arith.mulf %91, %89 : vector<1x128xf32>
    %93 = vector.shape_cast %92 : vector<1x128xf32> to vector<1x1x128xf32>
    %cst_27 = arith.constant dense<0.000000e+00> : vector<1xf32>
    %94 = vector.multi_reduction <add>, %93, %cst_27 [1, 2] : vector<1x1x128xf32> to vector<1xf32>
    %95 = vector.shape_cast %94 : vector<1xf32> to vector<1x1x1xf32>
    %96 = vector.extract %95[0, 0, 0] : f32 from vector<1x1x1xf32>
    %97 = tpu.iota {dimensions = array<i32: 1>} : vector<1x128xi32>
    %c0_i32 = arith.constant 0 : i32
    %98 = vector.broadcast %c0_i32 : i32 to vector<1x128xi32>
    %99 = arith.cmpi eq, %97, %98 : vector<1x128xi32>
    %100 = arith.extui %99 : vector<1x128xi1> to vector<1x128xi32>
    %101 = arith.sitofp %100 : vector<1x128xi32> to vector<1x128xf32>
    %102 = vector.broadcast %69 : f32 to vector<1x128xf32>
    %103 = arith.mulf %101, %102 : vector<1x128xf32>
    %c1_i32_28 = arith.constant 1 : i32
    %104 = vector.broadcast %c1_i32_28 : i32 to vector<1x128xi32>
    %105 = arith.cmpi eq, %97, %104 : vector<1x128xi32>
    %106 = arith.extui %105 : vector<1x128xi1> to vector<1x128xi32>
    %107 = arith.sitofp %106 : vector<1x128xi32> to vector<1x128xf32>
    %108 = vector.broadcast %79 : f32 to vector<1x128xf32>
    %109 = arith.mulf %107, %108 : vector<1x128xf32>
    %110 = arith.addf %103, %109 : vector<1x128xf32>
    %c2_i32 = arith.constant 2 : i32
    %111 = vector.broadcast %c2_i32 : i32 to vector<1x128xi32>
    %112 = arith.cmpi eq, %97, %111 : vector<1x128xi32>
    %113 = arith.extui %112 : vector<1x128xi1> to vector<1x128xi32>
    %114 = arith.sitofp %113 : vector<1x128xi32> to vector<1x128xf32>
    %115 = vector.broadcast %96 : f32 to vector<1x128xf32>
    %116 = arith.mulf %114, %115 : vector<1x128xf32>
    %117 = arith.addf %110, %116 : vector<1x128xf32>
    %c0_29 = arith.constant 0 : index
    %c0_30 = arith.constant 0 : index
    %c0_31 = arith.constant 0 : index
    %118 = vector.load %arg11[%c0_29, %c0_30, %c0_31] : memref<1x1x128xf32, #tpu.memory_space<vmem>>, vector<1x1x128xf32>
    %119 = vector.shape_cast %118 : vector<1x1x128xf32> to vector<1x128xf32>
    %120 = vector.shape_cast %117 : vector<1x128xf32> to vector<1x1x128xf32>
    tpu.vector_store %arg11[%c0_29, %c0_30, %c0_31], %120 {strides = array<i32>} : memref<1x1x128xf32, #tpu.memory_space<vmem>>, vector<1x1x128xf32>,
    return
  }
  func.func @transform_0(%arg0: i32) -> (i32, i32) {
    %c0_i32 = arith.constant 0 : i32
    %c0_i32_0 = arith.constant 0 : i32
    return %c0_i32, %arg0 : i32, i32
  }
  func.func @transform_1(%arg0: i32) -> (i32, i32) {
    %c0_i32 = arith.constant 0 : i32
    %c0_i32_0 = arith.constant 0 : i32
    %c0_i32_1 = arith.constant 0 : i32
    return %c0_i32, %c0_i32_0 : i32, i32
  }
  func.func @transform_2(%arg0: i32) -> (i32, i32) {
    %c0_i32 = arith.constant 0 : i32
    %c0_i32_0 = arith.constant 0 : i32
    %c0_i32_1 = arith.constant 0 : i32
    return %c0_i32, %c0_i32_0 : i32, i32
  }
  func.func @transform_3(%arg0: i32) -> (i32, i32) {
    %c0_i32 = arith.constant 0 : i32
    %c0_i32_0 = arith.constant 0 : i32
    %c0_i32_1 = arith.constant 0 : i32
    return %c0_i32, %c0_i32_0 : i32, i32
  }
  func.func @transform_4(%arg0: i32) -> (i32, i32) {
    %c0_i32 = arith.constant 0 : i32
    %c0_i32_0 = arith.constant 0 : i32
    %c0_i32_1 = arith.constant 0 : i32
    return %c0_i32, %c0_i32_0 : i32, i32
  }
  func.func @transform_5(%arg0: i32) -> (i32, i32) {
    %c0_i32 = arith.constant 0 : i32
    %c0_i32_0 = arith.constant 0 : i32
    %c0_i32_1 = arith.constant 0 : i32
    return %c0_i32, %c0_i32_0 : i32, i32
  }
  func.func @transform_6(%arg0: i32) -> (i32, i32) {
    %c0_i32 = arith.constant 0 : i32
    %c0_i32_0 = arith.constant 0 : i32
    %c0_i32_1 = arith.constant 0 : i32
    return %c0_i32, %c0_i32_0 : i32, i32
  }
  func.func @transform_7(%arg0: i32) -> (i32, i32) {
    %c0_i32 = arith.constant 0 : i32
    %c0_i32_0 = arith.constant 0 : i32
    %c0_i32_1 = arith.constant 0 : i32
    return %c0_i32, %c0_i32_0 : i32, i32
  }
  func.func @transform_8(%arg0: i32) -> (i32, i32) {
    %c0_i32 = arith.constant 0 : i32
    %c0_i32_0 = arith.constant 0 : i32
    %c0_i32_1 = arith.constant 0 : i32
    return %c0_i32, %c0_i32_0 : i32, i32
  }
  func.func @transform_9(%arg0: i32) -> (i32, i32) {
    %c0_i32 = arith.constant 0 : i32
    %c0_i32_0 = arith.constant 0 : i32
    return %c0_i32, %arg0 : i32, i32
  }
  func.func @transform_10(%arg0: i32) -> (i32, i32, i32) {
    %c0_i32 = arith.constant 0 : i32
    %c0_i32_0 = arith.constant 0 : i32
    %c0_i32_1 = arith.constant 0 : i32
    return %arg0, %c0_i32, %c0_i32_0 : i32, i32, i32
  }
}

</mosaic_0001>

<llo_original>
// kernel: tpu_custom_call.1
$region0: #{tpu_custom_call.1}
  #allocation0 [shape = 'u32[]', space=smem, size = 0x4, offset = 0x4, fixed_abs, tag = 'smem constant byte address 0x4 - core index']
  #allocation1 [shape = 'u32[144,128]{1,0:T(1,128)}', space=vmem, size = 0x12000, scoped, tag = 'internal scratch']
  #allocation2 [shape = 'f32[1,1]{1,0:T(1,128)S(1)}', space=vmem, size = 0x200, scoped, tag = 'scoped memory for tpu_custom_call.1']
  %s0 = inlined_call_operand.vmem [shape: f32[4,128], index: 0, kind: input, shape index: {}]
  %s1 = inlined_call_operand.vmem [shape: f32[64,4], index: 1, kind: input, shape index: {}]
  %s2 = inlined_call_operand.vmem [shape: f32[64,1], index: 2, kind: input, shape index: {}]
  %s3 = inlined_call_operand.vmem [shape: f32[64,64], index: 3, kind: input, shape index: {}]
  %s4 = inlined_call_operand.vmem [shape: f32[64,1], index: 4, kind: input, shape index: {}]
  %s5 = inlined_call_operand.vmem [shape: f32[32,64], index: 5, kind: input, shape index: {}]
  %s6 = inlined_call_operand.vmem [shape: f32[32,1], index: 6, kind: input, shape index: {}]
  %s7 = inlined_call_operand.vmem [shape: f32[32,1], index: 7, kind: input, shape index: {}]
  %s8 = inlined_call_operand.<no memory space> [shape: f32[1,1], index: 8, kind: input, shape index: {}]
  %s9 = inlined_call_operand.hbm [shape: f32[1,128], index: 9, kind: output, shape index: {0}]
  %s10 = inlined_call_operand.hbm [shape: f32[1,1,128], index: 10, kind: output, shape index: {1}]
  %11 = xla_tuple %s9, %s10
  %s12 = sld [smem:[#allocation0]]
  $region54: #{tpu_custom_call.1} parent=0
    _
  %s14 = ssub.s32 1, %s12
  %s15 = scalar_select 0, %s14, %s12
  %v16 = vstv %s8
  %17 = vst [vmem:[#allocation2] sm:$0x1] %v16
  $region1: #{tpu_custom_call.1} parent=0
    #allocation3 [shape = 'u8[512]{0}', space=vmem, size = 0x400, scoped, tag = 'output window, operand 0, single buffered']
    #allocation4 [shape = 's32[1]{0}', space=sflag, size = 0x4, scoped, tag = 'scoped memory for tpu_custom_call.1']
    #allocation5 [shape = 'u8[512]{0}', space=vmem, size = 0x400, scoped, tag = 'output window, operand 1, single buffered']
    #allocation6 [shape = 's32[1]{0}', space=sflag, size = 0x4, scoped, tag = 'scoped memory for tpu_custom_call.1']
    %18 = vsyncpa [#allocation4], 0
    %19 = vsyncpa [#allocation6], 0
    // Predicated region
    $region2: #{tpu_custom_call.1} parent=1 // pred_check
      _
    $region3: #{tpu_custom_call.1} parent=1 // pred_check_branch
      %21 = sbr.rel (0) target = $region5
    $region4: #{tpu_custom_call.1} parent=1 // pred_region
      _
    $region5: #{tpu_custom_call.1} parent=1 // pred_fallthru
      _
    // Predicated region
    $region6: #{tpu_custom_call.1} parent=1 // pred_check
      _
    $region7: #{tpu_custom_call.1} parent=1 // pred_check_branch
      %23 = sbr.rel (0) target = $region9
    $region8: #{tpu_custom_call.1} parent=1 // pred_region
      _
    $region9: #{tpu_custom_call.1} parent=1 // pred_fallthru
      _
    // Predicated region
    $region10: #{tpu_custom_call.1} parent=1 // pred_check
      _
    $region11: #{tpu_custom_call.1} parent=1 // pred_check_branch
      %25 = sbr.rel (0) target = $region13
    $region12: #{tpu_custom_call.1} parent=1 // pred_region
      _
    $region13: #{tpu_custom_call.1} parent=1 // pred_fallthru
      _
    // Predicated region
    $region14: #{tpu_custom_call.1} parent=1 // pred_check
      _
    $region15: #{tpu_custom_call.1} parent=1 // pred_check_branch
      %27 = sbr.rel (0) target = $region17
    $region16: #{tpu_custom_call.1} parent=1 // pred_region
      _
    $region17: #{tpu_custom_call.1} parent=1 // pred_fallthru
      _
    // Predicated region
    $region18: #{tpu_custom_call.1} parent=1 // pred_check
      _
    $region19: #{tpu_custom_call.1} parent=1 // pred_check_branch
      %29 = sbr.rel (0) target = $region21
    $region20: #{tpu_custom_call.1} parent=1 // pred_region
      _
    $region21: #{tpu_custom_call.1} parent=1 // pred_fallthru
      _
    // Predicated region
    $region22: #{tpu_custom_call.1} parent=1 // pred_check
      _
    $region23: #{tpu_custom_call.1} parent=1 // pred_check_branch
      %31 = sbr.rel (0) target = $region25
    $region24: #{tpu_custom_call.1} parent=1 // pred_region
      _
    $region25: #{tpu_custom_call.1} parent=1 // pred_fallthru
      _
    // Predicated region
    $region26: #{tpu_custom_call.1} parent=1 // pred_check
      _
    $region27: #{tpu_custom_call.1} parent=1 // pred_check_branch
      %33 = sbr.rel (0) target = $region29
    $region28: #{tpu_custom_call.1} parent=1 // pred_region
      _
    $region29: #{tpu_custom_call.1} parent=1 // pred_fallthru
      _
    // Predicated region
    $region30: #{tpu_custom_call.1} parent=1 // pred_check
      _
    $region31: #{tpu_custom_call.1} parent=1 // pred_check_branch
      %35 = sbr.rel (0) target = $region33
    $region32: #{tpu_custom_call.1} parent=1 // pred_region
      _
    $region33: #{tpu_custom_call.1} parent=1 // pred_fallthru
      _
    // Predicated region
    $region34: #{tpu_custom_call.1} parent=1 // pred_check
      _
    $region35: #{tpu_custom_call.1} parent=1 // pred_check_branch
      %37 = sbr.rel (0) target = $region37
    $region36: #{tpu_custom_call.1} parent=1 // pred_region
      _
    $region37: #{tpu_custom_call.1} parent=1 // pred_fallthru
      _
    %v38 = vld [vmem:[%s0] sm:$0xf]
    %v39 = vld [vmem:[%s1] sm:$0xff]
    %v40 = vld [vmem:[%s1 + $0x8] sm:$0xff]
    %v41 = vld [vmem:[%s1 + $0x10] sm:$0xff]
    %v42 = vld [vmem:[%s1 + $0x18] sm:$0xff]
    %v43 = vld [vmem:[%s1 + $0x20] sm:$0xff]
    %v44 = vld [vmem:[%s1 + $0x28] sm:$0xff]
    %v45 = vld [vmem:[%s1 + $0x30] sm:$0xff]
    %v46 = vld [vmem:[%s1 + $0x38] sm:$0xff]
    %v47 = vld [vmem:[%s2] sm:$0xff]
    %v48 = vld [vmem:[%s2 + $0x8] sm:$0xff]
    %v49 = vld [vmem:[%s2 + $0x10] sm:$0xff]
    %v50 = vld [vmem:[%s2 + $0x18] sm:$0xff]
    %v51 = vld [vmem:[%s2 + $0x20] sm:$0xff]
    %v52 = vld [vmem:[%s2 + $0x28] sm:$0xff]
    %v53 = vld [vmem:[%s2 + $0x30] sm:$0xff]
    %v54 = vld [vmem:[%s2 + $0x38] sm:$0xff]
    %56 = vset.pattern.permute.xlu0 0
    %57 = vperm.xlu0 %56, %v39
    %v58 = vpop.permute.xlu0 %57
    %61 = vset.pattern.permute.xlu0 0
    %62 = vperm.xlu0 %61, %v40
    %v63 = vpop.permute.xlu0 %62
    %66 = vset.pattern.permute.xlu0 0
    %67 = vperm.xlu0 %66, %v41
    %v68 = vpop.permute.xlu0 %67
    %71 = vset.pattern.permute.xlu0 0
    %72 = vperm.xlu0 %71, %v42
    %v73 = vpop.permute.xlu0 %72
    %76 = vset.pattern.permute.xlu0 0
    %77 = vperm.xlu0 %76, %v43
    %v78 = vpop.permute.xlu0 %77
    %81 = vset.pattern.permute.xlu0 0
    %82 = vperm.xlu0 %81, %v44
    %v83 = vpop.permute.xlu0 %82
    %86 = vset.pattern.permute.xlu0 0
    %87 = vperm.xlu0 %86, %v45
    %v88 = vpop.permute.xlu0 %87
    %91 = vset.pattern.permute.xlu0 0
    %92 = vperm.xlu0 %91, %v46
    %v93 = vpop.permute.xlu0 %92
    %v95 = vlaneseq
    %v96 = vshrl.u32 %v95, 7
    %v97 = vsub.s32 0, %v96
    %v98 = vrot.slane %v38, %v97
    %v99 = vmul.f32 %v58, %v98
    %v100 = vmul.f32 %v63, %v98
    %v101 = vmul.f32 %v68, %v98
    %v102 = vmul.f32 %v73, %v98
    %v103 = vmul.f32 %v78, %v98
    %v104 = vmul.f32 %v83, %v98
    %v105 = vmul.f32 %v88, %v98
    %v106 = vmul.f32 %v93, %v98
    %108 = vset.pattern.permute.xlu0 0
    %109 = vperm.xlu0 %108, %v47
    %v110 = vpop.permute.xlu0 %109
    %113 = vset.pattern.permute.xlu0 0
    %114 = vperm.xlu0 %113, %v48
    %v115 = vpop.permute.xlu0 %114
    %118 = vset.pattern.permute.xlu0 0
    %119 = vperm.xlu0 %118, %v49
    %v120 = vpop.permute.xlu0 %119
    %123 = vset.pattern.permute.xlu0 0
    %124 = vperm.xlu0 %123, %v50
    %v125 = vpop.permute.xlu0 %124
    %128 = vset.pattern.permute.xlu0 0
    %129 = vperm.xlu0 %128, %v51
    %v130 = vpop.permute.xlu0 %129
    %133 = vset.pattern.permute.xlu0 0
    %134 = vperm.xlu0 %133, %v52
    %v135 = vpop.permute.xlu0 %134
    %138 = vset.pattern.permute.xlu0 0
    %139 = vperm.xlu0 %138, %v53
    %v140 = vpop.permute.xlu0 %139
    %143 = vset.pattern.permute.xlu0 0
    %144 = vperm.xlu0 %143, %v54
    %v145 = vpop.permute.xlu0 %144
    %v147 = vadd.f32 %v110, %v99
    %v148 = vadd.f32 %v115, %v100
    %v149 = vadd.f32 %v120, %v101
    %v150 = vadd.f32 %v125, %v102
    %v151 = vadd.f32 %v130, %v103
    %v152 = vadd.f32 %v135, %v104
    %v153 = vadd.f32 %v140, %v105
    %v154 = vadd.f32 %v145, %v106
    %155 = vset.pattern.permute.xlu0 1
    %156 = vperm.xlu0 %155, %v39
    %v157 = vpop.permute.xlu0 %156
    %159 = vset.pattern.permute.xlu0 1
    %160 = vperm.xlu0 %159, %v40
    %v161 = vpop.permute.xlu0 %160
    %163 = vset.pattern.permute.xlu0 1
    %164 = vperm.xlu0 %163, %v41
    %v165 = vpop.permute.xlu0 %164
    %167 = vset.pattern.permute.xlu0 1
    %168 = vperm.xlu0 %167, %v42
    %v169 = vpop.permute.xlu0 %168
    %171 = vset.pattern.permute.xlu0 1
    %172 = vperm.xlu0 %171, %v43
    %v173 = vpop.permute.xlu0 %172
    %175 = vset.pattern.permute.xlu0 1
    %176 = vperm.xlu0 %175, %v44
    %v177 = vpop.permute.xlu0 %176
    %179 = vset.pattern.permute.xlu0 1
    %180 = vperm.xlu0 %179, %v45
    %v181 = vpop.permute.xlu0 %180
    %183 = vset.pattern.permute.xlu0 1
    %184 = vperm.xlu0 %183, %v46
    %v185 = vpop.permute.xlu0 %184
    %v187 = vlaneseq
    %v188 = vshrl.u32 %v187, 7
    %v189 = vsub.s32 1, %v188
    %v190 = vrot.slane %v38, %v189
    %v191 = vmul.f32 %v157, %v190
    %v192 = vmul.f32 %v161, %v190
    %v193 = vmul.f32 %v165, %v190
    %v194 = vmul.f32 %v169, %v190
    %v195 = vmul.f32 %v173, %v190
    %v196 = vmul.f32 %v177, %v190
    %v197 = vmul.f32 %v181, %v190
    %v198 = vmul.f32 %v185, %v190
    %v199 = vadd.f32 %v147, %v191
    %v200 = vadd.f32 %v148, %v192
    %v201 = vadd.f32 %v149, %v193
    %v202 = vadd.f32 %v150, %v194
    %v203 = vadd.f32 %v151, %v195
    %v204 = vadd.f32 %v152, %v196
    %v205 = vadd.f32 %v153, %v197
    %v206 = vadd.f32 %v154, %v198
    %207 = vset.pattern.permute.xlu0 2
    %208 = vperm.xlu0 %207, %v39
    %v209 = vpop.permute.xlu0 %208
    %211 = vset.pattern.permute.xlu0 2
    %212 = vperm.xlu0 %211, %v40
    %v213 = vpop.permute.xlu0 %212
    %215 = vset.pattern.permute.xlu0 2
    %216 = vperm.xlu0 %215, %v41
    %v217 = vpop.permute.xlu0 %216
    %219 = vset.pattern.permute.xlu0 2
    %220 = vperm.xlu0 %219, %v42
    %v221 = vpop.permute.xlu0 %220
    %223 = vset.pattern.permute.xlu0 2
    %224 = vperm.xlu0 %223, %v43
    %v225 = vpop.permute.xlu0 %224
    %227 = vset.pattern.permute.xlu0 2
    %228 = vperm.xlu0 %227, %v44
    %v229 = vpop.permute.xlu0 %228
    %231 = vset.pattern.permute.xlu0 2
    %232 = vperm.xlu0 %231, %v45
    %v233 = vpop.permute.xlu0 %232
    %235 = vset.pattern.permute.xlu0 2
    %236 = vperm.xlu0 %235, %v46
    %v237 = vpop.permute.xlu0 %236
    %v239 = vlaneseq
    %v240 = vshrl.u32 %v239, 7
    %v241 = vsub.s32 2, %v240
    %v242 = vrot.slane %v38, %v241
    %v243 = vmul.f32 %v209, %v242
    %v244 = vmul.f32 %v213, %v242
    %v245 = vmul.f32 %v217, %v242
    %v246 = vmul.f32 %v221, %v242
    %v247 = vmul.f32 %v225, %v242
    %v248 = vmul.f32 %v229, %v242
    %v249 = vmul.f32 %v233, %v242
    %v250 = vmul.f32 %v237, %v242
    %v251 = vadd.f32 %v199, %v243
    %v252 = vadd.f32 %v200, %v244
    %v253 = vadd.f32 %v201, %v245
    %v254 = vadd.f32 %v202, %v246
    %v255 = vadd.f32 %v203, %v247
    %v256 = vadd.f32 %v204, %v248
    %v257 = vadd.f32 %v205, %v249
    %v258 = vadd.f32 %v206, %v250
    %259 = vset.pattern.permute.xlu0 3
    %260 = vperm.xlu0 %259, %v39
    %v261 = vpop.permute.xlu0 %260
    %263 = vset.pattern.permute.xlu0 3
    %264 = vperm.xlu0 %263, %v40
    %v265 = vpop.permute.xlu0 %264
    %267 = vset.pattern.permute.xlu0 3
    %268 = vperm.xlu0 %267, %v41
    %v269 = vpop.permute.xlu0 %268
    %271 = vset.pattern.permute.xlu0 3
    %272 = vperm.xlu0 %271, %v42
    %v273 = vpop.permute.xlu0 %272
    %275 = vset.pattern.permute.xlu0 3
    %276 = vperm.xlu0 %275, %v43
    %v277 = vpop.permute.xlu0 %276
    %279 = vset.pattern.permute.xlu0 3
    %280 = vperm.xlu0 %279, %v44
    %v281 = vpop.permute.xlu0 %280
    %283 = vset.pattern.permute.xlu0 3
    %284 = vperm.xlu0 %283, %v45
    %v285 = vpop.permute.xlu0 %284
    %287 = vset.pattern.permute.xlu0 3
    %288 = vperm.xlu0 %287, %v46
    %v289 = vpop.permute.xlu0 %288
    %v291 = vlaneseq
    %v292 = vshrl.u32 %v291, 7
    %v293 = vsub.s32 3, %v292
    %v294 = vrot.slane %v38, %v293
    %v295 = vmul.f32 %v261, %v294
    %v296 = vmul.f32 %v265, %v294
    %v297 = vmul.f32 %v269, %v294
    %v298 = vmul.f32 %v273, %v294
    %v299 = vmul.f32 %v277, %v294
    %v300 = vmul.f32 %v281, %v294
    %v301 = vmul.f32 %v285, %v294
    %v302 = vmul.f32 %v289, %v294
    %v303 = vadd.f32 %v251, %v295
    %v304 = vadd.f32 %v252, %v296
    %v305 = vadd.f32 %v253, %v297
    %v306 = vadd.f32 %v254, %v298
    %v307 = vadd.f32 %v255, %v299
    %v308 = vadd.f32 %v256, %v300
    %v309 = vadd.f32 %v257, %v301
    %v310 = vadd.f32 %v258, %v302
    %v311 = vtanh.pop %v303
    %v312 = vtanh.pop %v304
    %v313 = vtanh.pop %v305
    %v314 = vtanh.pop %v306
    %v315 = vtanh.pop %v307
    %v316 = vtanh.pop %v308
    %v317 = vtanh.pop %v309
    %v318 = vtanh.pop %v310
    %v319 = vld [vmem:[%s3] sm:$0xff]
    %v320 = vld [vmem:[%s3 + $0x8] sm:$0xff]
    %v321 = vld [vmem:[%s3 + $0x10] sm:$0xff]
    %v322 = vld [vmem:[%s3 + $0x18] sm:$0xff]
    %v323 = vld [vmem:[%s3 + $0x20] sm:$0xff]
    %v324 = vld [vmem:[%s3 + $0x28] sm:$0xff]
    %v325 = vld [vmem:[%s3 + $0x30] sm:$0xff]
    %v326 = vld [vmem:[%s3 + $0x38] sm:$0xff]
    %v327 = vld [vmem:[%s4] sm:$0xff]
    %v328 = vld [vmem:[%s4 + $0x8] sm:$0xff]
    %v329 = vld [vmem:[%s4 + $0x10] sm:$0xff]
    %v330 = vld [vmem:[%s4 + $0x18] sm:$0xff]
    %v331 = vld [vmem:[%s4 + $0x20] sm:$0xff]
    %v332 = vld [vmem:[%s4 + $0x28] sm:$0xff]
    %v333 = vld [vmem:[%s4 + $0x30] sm:$0xff]
    %v334 = vld [vmem:[%s4 + $0x38] sm:$0xff]
    %336 = vset.pattern.permute.xlu0 0
    %337 = vperm.xlu0 %336, %v327
    %v338 = vpop.permute.xlu0 %337
    %341 = vset.pattern.permute.xlu0 0
    %342 = vperm.xlu0 %341, %v328
    %v343 = vpop.permute.xlu0 %342
    %346 = vset.pattern.permute.xlu0 0
    %347 = vperm.xlu0 %346, %v329
    %v348 = vpop.permute.xlu0 %347
    %351 = vset.pattern.permute.xlu0 0
    %352 = vperm.xlu0 %351, %v330
    %v353 = vpop.permute.xlu0 %352
    %356 = vset.pattern.permute.xlu0 0
    %357 = vperm.xlu0 %356, %v331
    %v358 = vpop.permute.xlu0 %357
    %361 = vset.pattern.permute.xlu0 0
    %362 = vperm.xlu0 %361, %v332
    %v363 = vpop.permute.xlu0 %362
    %366 = vset.pattern.permute.xlu0 0
    %367 = vperm.xlu0 %366, %v333
    %v368 = vpop.permute.xlu0 %367
    %371 = vset.pattern.permute.xlu0 0
    %372 = vperm.xlu0 %371, %v334
    %v373 = vpop.permute.xlu0 %372
    %vm375 = vcmask 523264
    %v377 = vsel %vm375, %v319, 0
    %v380 = vsel %vm375, %v320, 0
    %v383 = vsel %vm375, %v321, 0
    %v386 = vsel %vm375, %v322, 0
    %v389 = vsel %vm375, %v323, 0
    %v392 = vsel %vm375, %v324, 0
    %v395 = vsel %vm375, %v325, 0
    %v398 = vsel %vm375, %v326, 0
    %400 = vmatprep.subr.mxu0 0.0
    %401 = vmatpush1.msra.mxu0 0.0
    %402 = vmatprep.subr.mxu0 0.0
    %403 = vmatpush1.msra.mxu0 0.0
    %404 = vmatprep.subr.mxu0 0.0
    %405 = vmatpush1.msra.mxu0 0.0
    %406 = vmatprep.subr.mxu0 0.0
    %407 = vmatpush1.msra.mxu0 0.0
    %408 = vmatprep.subr.mxu0 0.0
    %409 = vmatpush1.msra.mxu0 0.0
    %410 = vmatprep.subr.mxu0 0.0
    %411 = vmatpush1.msra.mxu0 0.0
    %412 = vmatprep.subr.mxu0 0.0
    %413 = vmatpush1.msra.mxu0 0.0
    %414 = vmatprep.subr.mxu0 0.0
    %415 = vmatpush1.msra.mxu0 0.0
    %416 = vmatprep.subr.mxu0 0.0
    %v417 = vand.u32 %v318, 4294901760
    %418 = vmatpush1.msra.mxu0 %v417
    %419 = vmatprep.subr.mxu0 0.0
    %v420 = vand.u32 %v317, 4294901760
    %421 = vmatpush1.msra.mxu0 %v420
    %422 = vmatprep.subr.mxu0 0.0
    %v423 = vand.u32 %v316, 4294901760
    %424 = vmatpush1.msra.mxu0 %v423
    %425 = vmatprep.subr.mxu0 0.0
    %v426 = vand.u32 %v315, 4294901760
    %427 = vmatpush1.msra.mxu0 %v426
    %428 = vmatprep.subr.mxu0 0.0
    %v429 = vand.u32 %v314, 4294901760
    %430 = vmatpush1.msra.mxu0 %v429
    %431 = vmatprep.subr.mxu0 0.0
    %v432 = vand.u32 %v313, 4294901760
    %433 = vmatpush1.msra.mxu0 %v432
    %434 = vmatprep.subr.mxu0 0.0
    %v435 = vand.u32 %v312, 4294901760
    %436 = vmatpush1.msra.mxu0 %v435
    %437 = vmatprep.subr.mxu0 0.0
    %v438 = vand.u32 %v311, 4294901760
    %439 = vmatpush1.msra.mxu0 %v438
    %440 = vmatprep.subr.mxu0 0.0
    %441 = vmatpush2.msra.mxu0 0.0
    %442 = vmatprep.subr.mxu0 0.0
    %443 = vmatpush2.msra.mxu0 0.0
    %444 = vmatprep.subr.mxu0 0.0
    %445 = vmatpush2.msra.mxu0 0.0
    %446 = vmatprep.subr.mxu0 0.0
    %447 = vmatpush2.msra.mxu0 0.0
    %448 = vmatprep.subr.mxu0 0.0
    %449 = vmatpush2.msra.mxu0 0.0
    %450 = vmatprep.subr.mxu0 0.0
    %451 = vmatpush2.msra.mxu0 0.0
    %452 = vmatprep.subr.mxu0 0.0
    %453 = vmatpush2.msra.mxu0 0.0
    %454 = vmatprep.subr.mxu0 0.0
    %455 = vmatpush2.msra.mxu0 0.0
    %456 = vmatprep.subr.mxu0 0.0
    %457 = vmatpush2.msra.mxu0 0.0
    %458 = vmatprep.subr.mxu0 0.0
    %459 = vmatpush2.msra.mxu0 0.0
    %460 = vmatprep.subr.mxu0 0.0
    %461 = vmatpush2.msra.mxu0 0.0
    %462 = vmatprep.subr.mxu0 0.0
    %463 = vmatpush2.msra.mxu0 0.0
    %464 = vmatprep.subr.mxu0 0.0
    %465 = vmatpush2.msra.mxu0 0.0
    %466 = vmatprep.subr.mxu0 0.0
    %467 = vmatpush2.msra.mxu0 0.0
    %468 = vmatprep.subr.mxu0 0.0
    %469 = vmatpush2.msra.mxu0 0.0
    %470 = vmatprep.subr.mxu0 0.0
    %471 = vmatpush2.msra.mxu0 0.0
    %472 = vmatprep.mubr.f32.mxu0 0.0
    %v473 = vand.u32 %v377, 4294901760
    %v474 = vsub.f32 %v377, %v473
    %v475 = vand.u32 %v474, 4294901760
    %v476 = vsub.f32 %v474, %v475
    %v477 = vand.u32 %v476, 4294901760
    %478 = vmatmul.mubr.f32.gmra.mxu0 %v477
    %v479 = vpop.f32.mrf.mxu0
    %v480 = vadd.f32 %v338, %v479
    %v481 = vpop.f32.mrf.mxu0
    %482 = vmatprep.mubr.f32.mxu0 0.0
    %v483 = vand.u32 %v380, 4294901760
    %v484 = vsub.f32 %v380, %v483
    %v485 = vand.u32 %v484, 4294901760
    %v486 = vsub.f32 %v484, %v485
    %v487 = vand.u32 %v486, 4294901760
    %488 = vmatmul.mubr.f32.gmra.mxu0 %v487
    %v489 = vpop.f32.mrf.mxu0
    %v490 = vadd.f32 %v343, %v489
    %v491 = vpop.f32.mrf.mxu0
    %492 = vmatprep.mubr.f32.mxu0 0.0
    %v493 = vand.u32 %v383, 4294901760
    %v494 = vsub.f32 %v383, %v493
    %v495 = vand.u32 %v494, 4294901760
    %v496 = vsub.f32 %v494, %v495
    %v497 = vand.u32 %v496, 4294901760
    %498 = vmatmul.mubr.f32.gmra.mxu0 %v497
    %v499 = vpop.f32.mrf.mxu0
    %v500 = vadd.f32 %v348, %v499
    %v501 = vpop.f32.mrf.mxu0
    %502 = vmatprep.mubr.f32.mxu0 0.0
    %v503 = vand.u32 %v386, 4294901760
    %v504 = vsub.f32 %v386, %v503
    %v505 = vand.u32 %v504, 4294901760
    %v506 = vsub.f32 %v504, %v505
    %v507 = vand.u32 %v506, 4294901760
    %508 = vmatmul.mubr.f32.gmra.mxu0 %v507
    %v509 = vpop.f32.mrf.mxu0
    %v510 = vadd.f32 %v353, %v509
    %v511 = vpop.f32.mrf.mxu0
    %512 = vmatprep.mubr.f32.mxu0 0.0
    %v513 = vand.u32 %v389, 4294901760
    %v514 = vsub.f32 %v389, %v513
    %v515 = vand.u32 %v514, 4294901760
    %v516 = vsub.f32 %v514, %v515
    %v517 = vand.u32 %v516, 4294901760
    %518 = vmatmul.mubr.f32.gmra.mxu0 %v517
    %v519 = vpop.f32.mrf.mxu0
    %v520 = vadd.f32 %v358, %v519
    %v521 = vpop.f32.mrf.mxu0
    %522 = vmatprep.mubr.f32.mxu0 0.0
    %v523 = vand.u32 %v392, 4294901760
    %v524 = vsub.f32 %v392, %v523
    %v525 = vand.u32 %v524, 4294901760
    %v526 = vsub.f32 %v524, %v525
    %v527 = vand.u32 %v526, 4294901760
    %528 = vmatmul.mubr.f32.gmra.mxu0 %v527
    %v529 = vpop.f32.mrf.mxu0
    %v530 = vadd.f32 %v363, %v529
    %v531 = vpop.f32.mrf.mxu0
    %532 = vmatprep.mubr.f32.mxu0 0.0
    %v533 = vand.u32 %v395, 4294901760
    %v534 = vsub.f32 %v395, %v533
    %v535 = vand.u32 %v534, 4294901760
    %v536 = vsub.f32 %v534, %v535
    %v537 = vand.u32 %v536, 4294901760
    %538 = vmatmul.mubr.f32.gmra.mxu0 %v537
    %v539 = vpop.f32.mrf.mxu0
    %v540 = vadd.f32 %v368, %v539
    %v541 = vpop.f32.mrf.mxu0
    %542 = vmatprep.mubr.f32.mxu0 0.0
    %v543 = vand.u32 %v398, 4294901760
    %v544 = vsub.f32 %v398, %v543
    %v545 = vand.u32 %v544, 4294901760
    %v546 = vsub.f32 %v544, %v545
    %v547 = vand.u32 %v546, 4294901760
    %548 = vmatmul.mubr.f32.gmra.mxu0 %v547
    %v549 = vpop.f32.mrf.mxu0
    %v550 = vadd.f32 %v373, %v549
    %v551 = vpop.f32.mrf.mxu0
    %552 = vdwg.mxu0
    %553 = vmatprep.subr.mxu0 0.0
    %554 = vmatpush1.msra.mxu0 0.0
    %555 = vmatprep.subr.mxu0 0.0
    %556 = vmatpush1.msra.mxu0 0.0
    %557 = vmatprep.subr.mxu0 0.0
    %558 = vmatpush1.msra.mxu0 0.0
    %559 = vmatprep.subr.mxu0 0.0
    %560 = vmatpush1.msra.mxu0 0.0
    %561 = vmatprep.subr.mxu0 0.0
    %562 = vmatpush1.msra.mxu0 0.0
    %563 = vmatprep.subr.mxu0 0.0
    %564 = vmatpush1.msra.mxu0 0.0
    %565 = vmatprep.subr.mxu0 0.0
    %566 = vmatpush1.msra.mxu0 0.0
    %567 = vmatprep.subr.mxu0 0.0
    %568 = vmatpush1.msra.mxu0 0.0
    %569 = vmatprep.subr.mxu0 0.0
    %v570 = vand.u32 %v318, 4294901760
    %v571 = vsub.f32 %v318, %v570
    %v572 = vand.u32 %v571, 4294901760
    %v573 = vsub.f32 %v571, %v572
    %v574 = vand.u32 %v573, 4294901760
    %575 = vmatpush1.msra.mxu0 %v574
    %576 = vmatprep.subr.mxu0 0.0
    %v577 = vand.u32 %v317, 4294901760
    %v578 = vsub.f32 %v317, %v577
    %v579 = vand.u32 %v578, 4294901760
    %v580 = vsub.f32 %v578, %v579
    %v581 = vand.u32 %v580, 4294901760
    %582 = vmatpush1.msra.mxu0 %v581
    %583 = vmatprep.subr.mxu0 0.0
    %v584 = vand.u32 %v316, 4294901760
    %v585 = vsub.f32 %v316, %v584
    %v586 = vand.u32 %v585, 4294901760
    %v587 = vsub.f32 %v585, %v586
    %v588 = vand.u32 %v587, 4294901760
    %589 = vmatpush1.msra.mxu0 %v588
    %590 = vmatprep.subr.mxu0 0.0
    %v591 = vand.u32 %v315, 4294901760
    %v592 = vsub.f32 %v315, %v591
    %v593 = vand.u32 %v592, 4294901760
    %v594 = vsub.f32 %v592, %v593
    %v595 = vand.u32 %v594, 4294901760
    %596 = vmatpush1.msra.mxu0 %v595
    %597 = vmatprep.subr.mxu0 0.0
    %v598 = vand.u32 %v314, 4294901760
    %v599 = vsub.f32 %v314, %v598
    %v600 = vand.u32 %v599, 4294901760
    %v601 = vsub.f32 %v599, %v600
    %v602 = vand.u32 %v601, 4294901760
    %603 = vmatpush1.msra.mxu0 %v602
    %604 = vmatprep.subr.mxu0 0.0
    %v605 = vand.u32 %v313, 4294901760
    %v606 = vsub.f32 %v313, %v605
    %v607 = vand.u32 %v606, 4294901760
    %v608 = vsub.f32 %v606, %v607
    %v609 = vand.u32 %v608, 4294901760
    %610 = vmatpush1.msra.mxu0 %v609
    %611 = vmatprep.subr.mxu0 0.0
    %v612 = vand.u32 %v312, 4294901760
    %v613 = vsub.f32 %v312, %v612
    %v614 = vand.u32 %v613, 4294901760
    %v615 = vsub.f32 %v613, %v614
    %v616 = vand.u32 %v615, 4294901760
    %617 = vmatpush1.msra.mxu0 %v616
    %618 = vmatprep.subr.mxu0 0.0
    %v619 = vand.u32 %v311, 4294901760
    %v620 = vsub.f32 %v311, %v619
    %v621 = vand.u32 %v620, 4294901760
    %v622 = vsub.f32 %v620, %v621
    %v623 = vand.u32 %v622, 4294901760
    %624 = vmatpush1.msra.mxu0 %v623
    %625 = vmatprep.subr.mxu0 0.0
    %626 = vmatpush2.msra.mxu0 0.0
    %627 = vmatprep.subr.mxu0 0.0
    %628 = vmatpush2.msra.mxu0 0.0
    %629 = vmatprep.subr.mxu0 0.0
    %630 = vmatpush2.msra.mxu0 0.0
    %631 = vmatprep.subr.mxu0 0.0
    %632 = vmatpush2.msra.mxu0 0.0
    %633 = vmatprep.subr.mxu0 0.0
    %634 = vmatpush2.msra.mxu0 0.0
    %635 = vmatprep.subr.mxu0 0.0
    %636 = vmatpush2.msra.mxu0 0.0
    %637 = vmatprep.subr.mxu0 0.0
    %638 = vmatpush2.msra.mxu0 0.0
    %639 = vmatprep.subr.mxu0 0.0
    %640 = vmatpush2.msra.mxu0 0.0
    %641 = vmatprep.subr.mxu0 0.0
    %642 = vmatpush2.msra.mxu0 0.0
    %643 = vmatprep.subr.mxu0 0.0
    %644 = vmatpush2.msra.mxu0 0.0
    %645 = vmatprep.subr.mxu0 0.0
    %646 = vmatpush2.msra.mxu0 0.0
    %647 = vmatprep.subr.mxu0 0.0
    %648 = vmatpush2.msra.mxu0 0.0
    %649 = vmatprep.subr.mxu0 0.0
    %650 = vmatpush2.msra.mxu0 0.0
    %651 = vmatprep.subr.mxu0 0.0
    %652 = vmatpush2.msra.mxu0 0.0
    %653 = vmatprep.subr.mxu0 0.0
    %654 = vmatpush2.msra.mxu0 0.0
    %655 = vmatprep.subr.mxu0 0.0
    %656 = vmatpush2.msra.mxu0 0.0
    %657 = vmatprep.mubr.f32.mxu0 0.0
    %v658 = vand.u32 %v377, 4294901760
    %659 = vmatmul.mubr.f32.gmra.mxu0 %v658
    %v660 = vpop.f32.mrf.mxu0
    %v661 = vadd.f32 %v480, %v660
    %v662 = vpop.f32.mrf.mxu0
    %663 = vmatprep.mubr.f32.mxu0 0.0
    %v664 = vand.u32 %v380, 4294901760
    %665 = vmatmul.mubr.f32.gmra.mxu0 %v664
    %v666 = vpop.f32.mrf.mxu0
    %v667 = vadd.f32 %v490, %v666
    %v668 = vpop.f32.mrf.mxu0
    %669 = vmatprep.mubr.f32.mxu0 0.0
    %v670 = vand.u32 %v383, 4294901760
    %671 = vmatmul.mubr.f32.gmra.mxu0 %v670
    %v672 = vpop.f32.mrf.mxu0
    %v673 = vadd.f32 %v500, %v672
    %v674 = vpop.f32.mrf.mxu0
    %675 = vmatprep.mubr.f32.mxu0 0.0
    %v676 = vand.u32 %v386, 4294901760
    %677 = vmatmul.mubr.f32.gmra.mxu0 %v676
    %v678 = vpop.f32.mrf.mxu0
    %v679 = vadd.f32 %v510, %v678
    %v680 = vpop.f32.mrf.mxu0
    %681 = vmatprep.mubr.f32.mxu0 0.0
    %v682 = vand.u32 %v389, 4294901760
    %683 = vmatmul.mubr.f32.gmra.mxu0 %v682
    %v684 = vpop.f32.mrf.mxu0
    %v685 = vadd.f32 %v520, %v684
    %v686 = vpop.f32.mrf.mxu0
    %687 = vmatprep.mubr.f32.mxu0 0.0
    %v688 = vand.u32 %v392, 4294901760
    %689 = vmatmul.mubr.f32.gmra.mxu0 %v688
    %v690 = vpop.f32.mrf.mxu0
    %v691 = vadd.f32 %v530, %v690
    %v692 = vpop.f32.mrf.mxu0
    %693 = vmatprep.mubr.f32.mxu0 0.0
    %v694 = vand.u32 %v395, 4294901760
    %695 = vmatmul.mubr.f32.gmra.mxu0 %v694
    %v696 = vpop.f32.mrf.mxu0
    %v697 = vadd.f32 %v540, %v696
    %v698 = vpop.f32.mrf.mxu0
    %699 = vmatprep.mubr.f32.mxu0 0.0
    %v700 = vand.u32 %v398, 4294901760
    %701 = vmatmul.mubr.f32.gmra.mxu0 %v700
    %v702 = vpop.f32.mrf.mxu0
    %v703 = vadd.f32 %v550, %v702
    %v704 = vpop.f32.mrf.mxu0
    %705 = vdwg.mxu0
    %706 = vmatprep.subr.mxu0 0.0
    %707 = vmatpush1.msra.mxu0 0.0
    %708 = vmatprep.subr.mxu0 0.0
    %709 = vmatpush1.msra.mxu0 0.0
    %710 = vmatprep.subr.mxu0 0.0
    %711 = vmatpush1.msra.mxu0 0.0
    %712 = vmatprep.subr.mxu0 0.0
    %713 = vmatpush1.msra.mxu0 0.0
    %714 = vmatprep.subr.mxu0 0.0
    %715 = vmatpush1.msra.mxu0 0.0
    %716 = vmatprep.subr.mxu0 0.0
    %717 = vmatpush1.msra.mxu0 0.0
    %718 = vmatprep.subr.mxu0 0.0
    %719 = vmatpush1.msra.mxu0 0.0
    %720 = vmatprep.subr.mxu0 0.0
    %721 = vmatpush1.msra.mxu0 0.0
    %722 = vmatprep.subr.mxu0 0.0
    %v723 = vand.u32 %v318, 4294901760
    %v724 = vsub.f32 %v318, %v723
    %725 = vmatpush1.msra.mxu0 %v724
    %726 = vmatprep.subr.mxu0 0.0
    %v727 = vand.u32 %v317, 4294901760
    %v728 = vsub.f32 %v317, %v727
    %729 = vmatpush1.msra.mxu0 %v728
    %730 = vmatprep.subr.mxu0 0.0
    %v731 = vand.u32 %v316, 4294901760
    %v732 = vsub.f32 %v316, %v731
    %733 = vmatpush1.msra.mxu0 %v732
    %734 = vmatprep.subr.mxu0 0.0
    %v735 = vand.u32 %v315, 4294901760
    %v736 = vsub.f32 %v315, %v735
    %737 = vmatpush1.msra.mxu0 %v736
    %738 = vmatprep.subr.mxu0 0.0
    %v739 = vand.u32 %v314, 4294901760
    %v740 = vsub.f32 %v314, %v739
    %741 = vmatpush1.msra.mxu0 %v740
    %742 = vmatprep.subr.mxu0 0.0
    %v743 = vand.u32 %v313, 4294901760
    %v744 = vsub.f32 %v313, %v743
    %745 = vmatpush1.msra.mxu0 %v744
    %746 = vmatprep.subr.mxu0 0.0
    %v747 = vand.u32 %v312, 4294901760
    %v748 = vsub.f32 %v312, %v747
    %749 = vmatpush1.msra.mxu0 %v748
    %750 = vmatprep.subr.mxu0 0.0
    %v751 = vand.u32 %v311, 4294901760
    %v752 = vsub.f32 %v311, %v751
    %753 = vmatpush1.msra.mxu0 %v752
    %754 = vmatprep.subr.mxu0 0.0
    %755 = vmatpush2.msra.mxu0 0.0
    %756 = vmatprep.subr.mxu0 0.0
    %757 = vmatpush2.msra.mxu0 0.0
    %758 = vmatprep.subr.mxu0 0.0
    %759 = vmatpush2.msra.mxu0 0.0
    %760 = vmatprep.subr.mxu0 0.0
    %761 = vmatpush2.msra.mxu0 0.0
    %762 = vmatprep.subr.mxu0 0.0
    %763 = vmatpush2.msra.mxu0 0.0
    %764 = vmatprep.subr.mxu0 0.0
    %765 = vmatpush2.msra.mxu0 0.0
    %766 = vmatprep.subr.mxu0 0.0
    %767 = vmatpush2.msra.mxu0 0.0
    %768 = vmatprep.subr.mxu0 0.0
    %769 = vmatpush2.msra.mxu0 0.0
    %770 = vmatprep.subr.mxu0 0.0
    %771 = vmatpush2.msra.mxu0 0.0
    %772 = vmatprep.subr.mxu0 0.0
    %773 = vmatpush2.msra.mxu0 0.0
    %774 = vmatprep.subr.mxu0 0.0
    %775 = vmatpush2.msra.mxu0 0.0
    %776 = vmatprep.subr.mxu0 0.0
    %777 = vmatpush2.msra.mxu0 0.0
    %778 = vmatprep.subr.mxu0 0.0
    %779 = vmatpush2.msra.mxu0 0.0
    %780 = vmatprep.subr.mxu0 0.0
    %781 = vmatpush2.msra.mxu0 0.0
    %782 = vmatprep.subr.mxu0 0.0
    %783 = vmatpush2.msra.mxu0 0.0
    %784 = vmatprep.subr.mxu0 0.0
    %785 = vmatpush2.msra.mxu0 0.0
    %786 = vmatprep.mubr.f32.mxu0 0.0
    %v787 = vand.u32 %v377, 4294901760
    %v788 = vsub.f32 %v377, %v787
    %789 = vmatmul.mubr.f32.gmra.mxu0 %v788
    %v790 = vpop.f32.mrf.mxu0
    %v791 = vadd.f32 %v661, %v790
    %v792 = vpop.f32.mrf.mxu0
    %793 = vmatprep.mubr.f32.mxu0 0.0
    %v794 = vand.u32 %v380, 4294901760
    %v795 = vsub.f32 %v380, %v794
    %796 = vmatmul.mubr.f32.gmra.mxu0 %v795
    %v797 = vpop.f32.mrf.mxu0
    %v798 = vadd.f32 %v667, %v797
    %v799 = vpop.f32.mrf.mxu0
    %800 = vmatprep.mubr.f32.mxu0 0.0
    %v801 = vand.u32 %v383, 4294901760
    %v802 = vsub.f32 %v383, %v801
    %803 = vmatmul.mubr.f32.gmra.mxu0 %v802
    %v804 = vpop.f32.mrf.mxu0
    %v805 = vadd.f32 %v673, %v804
    %v806 = vpop.f32.mrf.mxu0
    %807 = vmatprep.mubr.f32.mxu0 0.0
    %v808 = vand.u32 %v386, 4294901760
    %v809 = vsub.f32 %v386, %v808
    %810 = vmatmul.mubr.f32.gmra.mxu0 %v809
    %v811 = vpop.f32.mrf.mxu0
    %v812 = vadd.f32 %v679, %v811
    %v813 = vpop.f32.mrf.mxu0
    %814 = vmatprep.mubr.f32.mxu0 0.0
    %v815 = vand.u32 %v389, 4294901760
    %v816 = vsub.f32 %v389, %v815
    %817 = vmatmul.mubr.f32.gmra.mxu0 %v816
    %v818 = vpop.f32.mrf.mxu0
    %v819 = vadd.f32 %v685, %v818
    %v820 = vpop.f32.mrf.mxu0
    %821 = vmatprep.mubr.f32.mxu0 0.0
    %v822 = vand.u32 %v392, 4294901760
    %v823 = vsub.f32 %v392, %v822
    %824 = vmatmul.mubr.f32.gmra.mxu0 %v823
    %v825 = vpop.f32.mrf.mxu0
    %v826 = vadd.f32 %v691, %v825
    %v827 = vpop.f32.mrf.mxu0
    %828 = vmatprep.mubr.f32.mxu0 0.0
    %v829 = vand.u32 %v395, 4294901760
    %v830 = vsub.f32 %v395, %v829
    %831 = vmatmul.mubr.f32.gmra.mxu0 %v830
    %v832 = vpop.f32.mrf.mxu0
    %v833 = vadd.f32 %v697, %v832
    %v834 = vpop.f32.mrf.mxu0
    %835 = vmatprep.mubr.f32.mxu0 0.0
    %v836 = vand.u32 %v398, 4294901760
    %v837 = vsub.f32 %v398, %v836
    %838 = vmatmul.mubr.f32.gmra.mxu0 %v837
    %v839 = vpop.f32.mrf.mxu0
    %v840 = vadd.f32 %v703, %v839
    %v841 = vpop.f32.mrf.mxu0
    %842 = vdwg.mxu0
    %843 = vmatprep.subr.mxu0 0.0
    %844 = vmatpush1.msra.mxu0 0.0
    %845 = vmatprep.subr.mxu0 0.0
    %846 = vmatpush1.msra.mxu0 0.0
    %847 = vmatprep.subr.mxu0 0.0
    %848 = vmatpush1.msra.mxu0 0.0
    %849 = vmatprep.subr.mxu0 0.0
    %850 = vmatpush1.msra.mxu0 0.0
    %851 = vmatprep.subr.mxu0 0.0
    %852 = vmatpush1.msra.mxu0 0.0
    %853 = vmatprep.subr.mxu0 0.0
    %854 = vmatpush1.msra.mxu0 0.0
    %855 = vmatprep.subr.mxu0 0.0
    %856 = vmatpush1.msra.mxu0 0.0
    %857 = vmatprep.subr.mxu0 0.0
    %858 = vmatpush1.msra.mxu0 0.0
    %859 = vmatprep.subr.mxu0 0.0
    %v860 = vand.u32 %v318, 4294901760
    %861 = vmatpush1.msra.mxu0 %v860
    %862 = vmatprep.subr.mxu0 0.0
    %v863 = vand.u32 %v317, 4294901760
    %864 = vmatpush1.msra.mxu0 %v863
    %865 = vmatprep.subr.mxu0 0.0
    %v866 = vand.u32 %v316, 4294901760
    %867 = vmatpush1.msra.mxu0 %v866
    %868 = vmatprep.subr.mxu0 0.0
    %v869 = vand.u32 %v315, 4294901760
    %870 = vmatpush1.msra.mxu0 %v869
    %871 = vmatprep.subr.mxu0 0.0
    %v872 = vand.u32 %v314, 4294901760
    %873 = vmatpush1.msra.mxu0 %v872
    %874 = vmatprep.subr.mxu0 0.0
    %v875 = vand.u32 %v313, 4294901760
    %876 = vmatpush1.msra.mxu0 %v875
    %877 = vmatprep.subr.mxu0 0.0
    %v878 = vand.u32 %v312, 4294901760
    %879 = vmatpush1.msra.mxu0 %v878
    %880 = vmatprep.subr.mxu0 0.0
    %v881 = vand.u32 %v311, 4294901760
    %882 = vmatpush1.msra.mxu0 %v881
    %883 = vmatprep.subr.mxu0 0.0
    %884 = vmatpush2.msra.mxu0 0.0
    %885 = vmatprep.subr.mxu0 0.0
    %886 = vmatpush2.msra.mxu0 0.0
    %887 = vmatprep.subr.mxu0 0.0
    %888 = vmatpush2.msra.mxu0 0.0
    %889 = vmatprep.subr.mxu0 0.0
    %890 = vmatpush2.msra.mxu0 0.0
    %891 = vmatprep.subr.mxu0 0.0
    %892 = vmatpush2.msra.mxu0 0.0
    %893 = vmatprep.subr.mxu0 0.0
    %894 = vmatpush2.msra.mxu0 0.0
    %895 = vmatprep.subr.mxu0 0.0
    %896 = vmatpush2.msra.mxu0 0.0
    %897 = vmatprep.subr.mxu0 0.0
    %898 = vmatpush2.msra.mxu0 0.0
    %899 = vmatprep.subr.mxu0 0.0
    %900 = vmatpush2.msra.mxu0 0.0
    %901 = vmatprep.subr.mxu0 0.0
    %902 = vmatpush2.msra.mxu0 0.0
    %903 = vmatprep.subr.mxu0 0.0
    %904 = vmatpush2.msra.mxu0 0.0
    %905 = vmatprep.subr.mxu0 0.0
    %906 = vmatpush2.msra.mxu0 0.0
    %907 = vmatprep.subr.mxu0 0.0
    %908 = vmatpush2.msra.mxu0 0.0
    %909 = vmatprep.subr.mxu0 0.0
    %910 = vmatpush2.msra.mxu0 0.0
    %911 = vmatprep.subr.mxu0 0.0
    %912 = vmatpush2.msra.mxu0 0.0
    %913 = vmatprep.subr.mxu0 0.0
    %914 = vmatpush2.msra.mxu0 0.0
    %915 = vmatprep.mubr.f32.mxu0 0.0
    %v916 = vand.u32 %v377, 4294901760
    %v917 = vsub.f32 %v377, %v916
    %v918 = vand.u32 %v917, 4294901760
    %919 = vmatmul.mubr.f32.gmra.mxu0 %v918
    %v920 = vpop.f32.mrf.mxu0
    %v921 = vadd.f32 %v791, %v920
    %v922 = vpop.f32.mrf.mxu0
    %923 = vmatprep.mubr.f32.mxu0 0.0
    %v924 = vand.u32 %v380, 4294901760
    %v925 = vsub.f32 %v380, %v924
    %v926 = vand.u32 %v925, 4294901760
    %927 = vmatmul.mubr.f32.gmra.mxu0 %v926
    %v928 = vpop.f32.mrf.mxu0
    %v929 = vadd.f32 %v798, %v928
    %v930 = vpop.f32.mrf.mxu0
    %931 = vmatprep.mubr.f32.mxu0 0.0
    %v932 = vand.u32 %v383, 4294901760
    %v933 = vsub.f32 %v383, %v932
    %v934 = vand.u32 %v933, 4294901760
    %935 = vmatmul.mubr.f32.gmra.mxu0 %v934
    %v936 = vpop.f32.mrf.mxu0
    %v937 = vadd.f32 %v805, %v936
    %v938 = vpop.f32.mrf.mxu0
    %939 = vmatprep.mubr.f32.mxu0 0.0
    %v940 = vand.u32 %v386, 4294901760
    %v941 = vsub.f32 %v386, %v940
    %v942 = vand.u32 %v941, 4294901760
    %943 = vmatmul.mubr.f32.gmra.mxu0 %v942
    %v944 = vpop.f32.mrf.mxu0
    %v945 = vadd.f32 %v812, %v944
    %v946 = vpop.f32.mrf.mxu0
    %947 = vmatprep.mubr.f32.mxu0 0.0
    %v948 = vand.u32 %v389, 4294901760
    %v949 = vsub.f32 %v389, %v948
    %v950 = vand.u32 %v949, 4294901760
    %951 = vmatmul.mubr.f32.gmra.mxu0 %v950
    %v952 = vpop.f32.mrf.mxu0
    %v953 = vadd.f32 %v819, %v952
    %v954 = vpop.f32.mrf.mxu0
    %955 = vmatprep.mubr.f32.mxu0 0.0
    %v956 = vand.u32 %v392, 4294901760
    %v957 = vsub.f32 %v392, %v956
    %v958 = vand.u32 %v957, 4294901760
    %959 = vmatmul.mubr.f32.gmra.mxu0 %v958
    %v960 = vpop.f32.mrf.mxu0
    %v961 = vadd.f32 %v826, %v960
    %v962 = vpop.f32.mrf.mxu0
    %963 = vmatprep.mubr.f32.mxu0 0.0
    %v964 = vand.u32 %v395, 4294901760
    %v965 = vsub.f32 %v395, %v964
    %v966 = vand.u32 %v965, 4294901760
    %967 = vmatmul.mubr.f32.gmra.mxu0 %v966
    %v968 = vpop.f32.mrf.mxu0
    %v969 = vadd.f32 %v833, %v968
    %v970 = vpop.f32.mrf.mxu0
    %971 = vmatprep.mubr.f32.mxu0 0.0
    %v972 = vand.u32 %v398, 4294901760
    %v973 = vsub.f32 %v398, %v972
    %v974 = vand.u32 %v973, 4294901760
    %975 = vmatmul.mubr.f32.gmra.mxu0 %v974
    %v976 = vpop.f32.mrf.mxu0
    %v977 = vadd.f32 %v840, %v976
    %v978 = vpop.f32.mrf.mxu0
    %979 = vdwg.mxu0
    %980 = vmatprep.subr.mxu0 0.0
    %981 = vmatpush1.msra.mxu0 0.0
    %982 = vmatprep.subr.mxu0 0.0
    %983 = vmatpush1.msra.mxu0 0.0
    %984 = vmatprep.subr.mxu0 0.0
    %985 = vmatpush1.msra.mxu0 0.0
    %986 = vmatprep.subr.mxu0 0.0
    %987 = vmatpush1.msra.mxu0 0.0
    %988 = vmatprep.subr.mxu0 0.0
    %989 = vmatpush1.msra.mxu0 0.0
    %990 = vmatprep.subr.mxu0 0.0
    %991 = vmatpush1.msra.mxu0 0.0
    %992 = vmatprep.subr.mxu0 0.0
    %993 = vmatpush1.msra.mxu0 0.0
    %994 = vmatprep.subr.mxu0 0.0
    %995 = vmatpush1.msra.mxu0 0.0
    %996 = vmatprep.subr.mxu0 0.0
    %v997 = vand.u32 %v318, 4294901760
    %v998 = vsub.f32 %v318, %v997
    %v999 = vand.u32 %v998, 4294901760
    %1000 = vmatpush1.msra.mxu0 %v999
    %1001 = vmatprep.subr.mxu0 0.0
    %v1002 = vand.u32 %v317, 4294901760
    %v1003 = vsub.f32 %v317, %v1002
    %v1004 = vand.u32 %v1003, 4294901760
    %1005 = vmatpush1.msra.mxu0 %v1004
    %1006 = vmatprep.subr.mxu0 0.0
    %v1007 = vand.u32 %v316, 4294901760
    %v1008 = vsub.f32 %v316, %v1007
    %v1009 = vand.u32 %v1008, 4294901760
    %1010 = vmatpush1.msra.mxu0 %v1009
    %1011 = vmatprep.subr.mxu0 0.0
    %v1012 = vand.u32 %v315, 4294901760
    %v1013 = vsub.f32 %v315, %v1012
    %v1014 = vand.u32 %v1013, 4294901760
    %1015 = vmatpush1.msra.mxu0 %v1014
    %1016 = vmatprep.subr.mxu0 0.0
    %v1017 = vand.u32 %v314, 4294901760
    %v1018 = vsub.f32 %v314, %v1017
    %v1019 = vand.u32 %v1018, 4294901760
    %1020 = vmatpush1.msra.mxu0 %v1019
    %1021 = vmatprep.subr.mxu0 0.0
    %v1022 = vand.u32 %v313, 4294901760
    %v1023 = vsub.f32 %v313, %v1022
    %v1024 = vand.u32 %v1023, 4294901760
    %1025 = vmatpush1.msra.mxu0 %v1024
    %1026 = vmatprep.subr.mxu0 0.0
    %v1027 = vand.u32 %v312, 4294901760
    %v1028 = vsub.f32 %v312, %v1027
    %v1029 = vand.u32 %v1028, 4294901760
    %1030 = vmatpush1.msra.mxu0 %v1029
    %1031 = vmatprep.subr.mxu0 0.0
    %v1032 = vand.u32 %v311, 4294901760
    %v1033 = vsub.f32 %v311, %v1032
    %v1034 = vand.u32 %v1033, 4294901760
    %1035 = vmatpush1.msra.mxu0 %v1034
    %1036 = vmatprep.subr.mxu0 0.0
    %1037 = vmatpush2.msra.mxu0 0.0
    %1038 = vmatprep.subr.mxu0 0.0
    %1039 = vmatpush2.msra.mxu0 0.0
    %1040 = vmatprep.subr.mxu0 0.0
    %1041 = vmatpush2.msra.mxu0 0.0
    %1042 = vmatprep.subr.mxu0 0.0
    %1043 = vmatpush2.msra.mxu0 0.0
    %1044 = vmatprep.subr.mxu0 0.0
    %1045 = vmatpush2.msra.mxu0 0.0
    %1046 = vmatprep.subr.mxu0 0.0
    %1047 = vmatpush2.msra.mxu0 0.0
    %1048 = vmatprep.subr.mxu0 0.0
    %1049 = vmatpush2.msra.mxu0 0.0
    %1050 = vmatprep.subr.mxu0 0.0
    %1051 = vmatpush2.msra.mxu0 0.0
    %1052 = vmatprep.subr.mxu0 0.0
    %1053 = vmatpush2.msra.mxu0 0.0
    %1054 = vmatprep.subr.mxu0 0.0
    %1055 = vmatpush2.msra.mxu0 0.0
    %1056 = vmatprep.subr.mxu0 0.0
    %1057 = vmatpush2.msra.mxu0 0.0
    %1058 = vmatprep.subr.mxu0 0.0
    %1059 = vmatpush2.msra.mxu0 0.0
    %1060 = vmatprep.subr.mxu0 0.0
    %1061 = vmatpush2.msra.mxu0 0.0
    %1062 = vmatprep.subr.mxu0 0.0
    %1063 = vmatpush2.msra.mxu0 0.0
    %1064 = vmatprep.subr.mxu0 0.0
    %1065 = vmatpush2.msra.mxu0 0.0
    %1066 = vmatprep.subr.mxu0 0.0
    %1067 = vmatpush2.msra.mxu0 0.0
    %1068 = vmatprep.mubr.f32.mxu0 0.0
    %v1069 = vand.u32 %v377, 4294901760
    %1070 = vmatmul.mubr.f32.gmra.mxu0 %v1069
    %v1071 = vpop.f32.mrf.mxu0
    %v1072 = vadd.f32 %v921, %v1071
    %v1073 = vpop.f32.mrf.mxu0
    %1074 = vmatprep.mubr.f32.mxu0 0.0
    %v1075 = vand.u32 %v380, 4294901760
    %1076 = vmatmul.mubr.f32.gmra.mxu0 %v1075
    %v1077 = vpop.f32.mrf.mxu0
    %v1078 = vadd.f32 %v929, %v1077
    %v1079 = vpop.f32.mrf.mxu0
    %1080 = vmatprep.mubr.f32.mxu0 0.0
    %v1081 = vand.u32 %v383, 4294901760
    %1082 = vmatmul.mubr.f32.gmra.mxu0 %v1081
    %v1083 = vpop.f32.mrf.mxu0
    %v1084 = vadd.f32 %v937, %v1083
    %v1085 = vpop.f32.mrf.mxu0
    %1086 = vmatprep.mubr.f32.mxu0 0.0
    %v1087 = vand.u32 %v386, 4294901760
    %1088 = vmatmul.mubr.f32.gmra.mxu0 %v1087
    %v1089 = vpop.f32.mrf.mxu0
    %v1090 = vadd.f32 %v945, %v1089
    %v1091 = vpop.f32.mrf.mxu0
    %1092 = vmatprep.mubr.f32.mxu0 0.0
    %v1093 = vand.u32 %v389, 4294901760
    %1094 = vmatmul.mubr.f32.gmra.mxu0 %v1093
    %v1095 = vpop.f32.mrf.mxu0
    %v1096 = vadd.f32 %v953, %v1095
    %v1097 = vpop.f32.mrf.mxu0
    %1098 = vmatprep.mubr.f32.mxu0 0.0
    %v1099 = vand.u32 %v392, 4294901760
    %1100 = vmatmul.mubr.f32.gmra.mxu0 %v1099
    %v1101 = vpop.f32.mrf.mxu0
    %v1102 = vadd.f32 %v961, %v1101
    %v1103 = vpop.f32.mrf.mxu0
    %1104 = vmatprep.mubr.f32.mxu0 0.0
    %v1105 = vand.u32 %v395, 4294901760
    %1106 = vmatmul.mubr.f32.gmra.mxu0 %v1105
    %v1107 = vpop.f32.mrf.mxu0
    %v1108 = vadd.f32 %v969, %v1107
    %v1109 = vpop.f32.mrf.mxu0
    %1110 = vmatprep.mubr.f32.mxu0 0.0
    %v1111 = vand.u32 %v398, 4294901760
    %1112 = vmatmul.mubr.f32.gmra.mxu0 %v1111
    %v1113 = vpop.f32.mrf.mxu0
    %v1114 = vadd.f32 %v977, %v1113
    %v1115 = vpop.f32.mrf.mxu0
    %1116 = vdwg.mxu0
    %1117 = vmatprep.subr.mxu0 0.0
    %1118 = vmatpush1.msra.mxu0 0.0
    %1119 = vmatprep.subr.mxu0 0.0
    %1120 = vmatpush1.msra.mxu0 0.0
    %1121 = vmatprep.subr.mxu0 0.0
    %1122 = vmatpush1.msra.mxu0 0.0
    %1123 = vmatprep.subr.mxu0 0.0
    %1124 = vmatpush1.msra.mxu0 0.0
    %1125 = vmatprep.subr.mxu0 0.0
    %1126 = vmatpush1.msra.mxu0 0.0
    %1127 = vmatprep.subr.mxu0 0.0
    %1128 = vmatpush1.msra.mxu0 0.0
    %1129 = vmatprep.subr.mxu0 0.0
    %1130 = vmatpush1.msra.mxu0 0.0
    %1131 = vmatprep.subr.mxu0 0.0
    %1132 = vmatpush1.msra.mxu0 0.0
    %1133 = vmatprep.subr.mxu0 0.0
    %v1134 = vand.u32 %v318, 4294901760
    %1135 = vmatpush1.msra.mxu0 %v1134
    %1136 = vmatprep.subr.mxu0 0.0
    %v1137 = vand.u32 %v317, 4294901760
    %1138 = vmatpush1.msra.mxu0 %v1137
    %1139 = vmatprep.subr.mxu0 0.0
    %v1140 = vand.u32 %v316, 4294901760
    %1141 = vmatpush1.msra.mxu0 %v1140
    %1142 = vmatprep.subr.mxu0 0.0
    %v1143 = vand.u32 %v315, 4294901760
    %1144 = vmatpush1.msra.mxu0 %v1143
    %1145 = vmatprep.subr.mxu0 0.0
    %v1146 = vand.u32 %v314, 4294901760
    %1147 = vmatpush1.msra.mxu0 %v1146
    %1148 = vmatprep.subr.mxu0 0.0
    %v1149 = vand.u32 %v313, 4294901760
    %1150 = vmatpush1.msra.mxu0 %v1149
    %1151 = vmatprep.subr.mxu0 0.0
    %v1152 = vand.u32 %v312, 4294901760
    %1153 = vmatpush1.msra.mxu0 %v1152
    %1154 = vmatprep.subr.mxu0 0.0
    %v1155 = vand.u32 %v311, 4294901760
    %1156 = vmatpush1.msra.mxu0 %v1155
    %1157 = vmatprep.subr.mxu0 0.0
    %1158 = vmatpush2.msra.mxu0 0.0
    %1159 = vmatprep.subr.mxu0 0.0
    %1160 = vmatpush2.msra.mxu0 0.0
    %1161 = vmatprep.subr.mxu0 0.0
    %1162 = vmatpush2.msra.mxu0 0.0
    %1163 = vmatprep.subr.mxu0 0.0
    %1164 = vmatpush2.msra.mxu0 0.0
    %1165 = vmatprep.subr.mxu0 0.0
    %1166 = vmatpush2.msra.mxu0 0.0
    %1167 = vmatprep.subr.mxu0 0.0
    %1168 = vmatpush2.msra.mxu0 0.0
    %1169 = vmatprep.subr.mxu0 0.0
    %1170 = vmatpush2.msra.mxu0 0.0
    %1171 = vmatprep.subr.mxu0 0.0
    %1172 = vmatpush2.msra.mxu0 0.0
    %1173 = vmatprep.subr.mxu0 0.0
    %1174 = vmatpush2.msra.mxu0 0.0
    %1175 = vmatprep.subr.mxu0 0.0
    %1176 = vmatpush2.msra.mxu0 0.0
    %1177 = vmatprep.subr.mxu0 0.0
    %1178 = vmatpush2.msra.mxu0 0.0
    %1179 = vmatprep.subr.mxu0 0.0
    %1180 = vmatpush2.msra.mxu0 0.0
    %1181 = vmatprep.subr.mxu0 0.0
    %1182 = vmatpush2.msra.mxu0 0.0
    %1183 = vmatprep.subr.mxu0 0.0
    %1184 = vmatpush2.msra.mxu0 0.0
    %1185 = vmatprep.subr.mxu0 0.0
    %1186 = vmatpush2.msra.mxu0 0.0
    %1187 = vmatprep.subr.mxu0 0.0
    %1188 = vmatpush2.msra.mxu0 0.0
    %1189 = vmatprep.mubr.f32.mxu0 0.0
    %v1190 = vand.u32 %v377, 4294901760
    %1191 = vmatmul.mubr.f32.gmra.mxu0 %v1190
    %v1192 = vpop.f32.mrf.mxu0
    %v1193 = vadd.f32 %v1072, %v1192
    %v1194 = vpop.f32.mrf.mxu0
    %1195 = vmatprep.mubr.f32.mxu0 0.0
    %v1196 = vand.u32 %v380, 4294901760
    %1197 = vmatmul.mubr.f32.gmra.mxu0 %v1196
    %v1198 = vpop.f32.mrf.mxu0
    %v1199 = vadd.f32 %v1078, %v1198
    %v1200 = vpop.f32.mrf.mxu0
    %1201 = vmatprep.mubr.f32.mxu0 0.0
    %v1202 = vand.u32 %v383, 4294901760
    %1203 = vmatmul.mubr.f32.gmra.mxu0 %v1202
    %v1204 = vpop.f32.mrf.mxu0
    %v1205 = vadd.f32 %v1084, %v1204
    %v1206 = vpop.f32.mrf.mxu0
    %1207 = vmatprep.mubr.f32.mxu0 0.0
    %v1208 = vand.u32 %v386, 4294901760
    %1209 = vmatmul.mubr.f32.gmra.mxu0 %v1208
    %v1210 = vpop.f32.mrf.mxu0
    %v1211 = vadd.f32 %v1090, %v1210
    %v1212 = vpop.f32.mrf.mxu0
    %1213 = vmatprep.mubr.f32.mxu0 0.0
    %v1214 = vand.u32 %v389, 4294901760
    %1215 = vmatmul.mubr.f32.gmra.mxu0 %v1214
    %v1216 = vpop.f32.mrf.mxu0
    %v1217 = vadd.f32 %v1096, %v1216
    %v1218 = vpop.f32.mrf.mxu0
    %1219 = vmatprep.mubr.f32.mxu0 0.0
    %v1220 = vand.u32 %v392, 4294901760
    %1221 = vmatmul.mubr.f32.gmra.mxu0 %v1220
    %v1222 = vpop.f32.mrf.mxu0
    %v1223 = vadd.f32 %v1102, %v1222
    %v1224 = vpop.f32.mrf.mxu0
    %1225 = vmatprep.mubr.f32.mxu0 0.0
    %v1226 = vand.u32 %v395, 4294901760
    %1227 = vmatmul.mubr.f32.gmra.mxu0 %v1226
    %v1228 = vpop.f32.mrf.mxu0
    %v1229 = vadd.f32 %v1108, %v1228
    %v1230 = vpop.f32.mrf.mxu0
    %1231 = vmatprep.mubr.f32.mxu0 0.0
    %v1232 = vand.u32 %v398, 4294901760
    %1233 = vmatmul.mubr.f32.gmra.mxu0 %v1232
    %v1234 = vpop.f32.mrf.mxu0
    %v1235 = vadd.f32 %v1114, %v1234
    %v1236 = vpop.f32.mrf.mxu0
    %1237 = vdwg.mxu0
    %v1238 = vtanh.pop %v1193
    %v1239 = vtanh.pop %v1199
    %v1240 = vtanh.pop %v1205
    %v1241 = vtanh.pop %v1211
    %v1242 = vtanh.pop %v1217
    %v1243 = vtanh.pop %v1223
    %v1244 = vtanh.pop %v1229
    %v1245 = vtanh.pop %v1235
    %v1246 = vld [vmem:[%s5] sm:$0xff]
    %v1247 = vld [vmem:[%s5 + $0x8] sm:$0xff]
    %v1248 = vld [vmem:[%s5 + $0x10] sm:$0xff]
    %v1249 = vld [vmem:[%s5 + $0x18] sm:$0xff]
    %v1250 = vld [vmem:[%s6] sm:$0xff]
    %v1251 = vld [vmem:[%s6 + $0x8] sm:$0xff]
    %v1252 = vld [vmem:[%s6 + $0x10] sm:$0xff]
    %v1253 = vld [vmem:[%s6 + $0x18] sm:$0xff]
    %1255 = vset.pattern.permute.xlu0 0
    %1256 = vperm.xlu0 %1255, %v1250
    %v1257 = vpop.permute.xlu0 %1256
    %1260 = vset.pattern.permute.xlu0 0
    %1261 = vperm.xlu0 %1260, %v1251
    %v1262 = vpop.permute.xlu0 %1261
    %1265 = vset.pattern.permute.xlu0 0
    %1266 = vperm.xlu0 %1265, %v1252
    %v1267 = vpop.permute.xlu0 %1266
    %1270 = vset.pattern.permute.xlu0 0
    %1271 = vperm.xlu0 %1270, %v1253
    %v1272 = vpop.permute.xlu0 %1271
    %v1275 = vsel %vm375, %v1246, 0
    %v1278 = vsel %vm375, %v1247, 0
    %v1281 = vsel %vm375, %v1248, 0
    %v1284 = vsel %vm375, %v1249, 0
    %1286 = vmatprep.subr.mxu0 0.0
    %1287 = vmatpush1.msra.mxu0 0.0
    %1288 = vmatprep.subr.mxu0 0.0
    %1289 = vmatpush1.msra.mxu0 0.0
    %1290 = vmatprep.subr.mxu0 0.0
    %1291 = vmatpush1.msra.mxu0 0.0
    %1292 = vmatprep.subr.mxu0 0.0
    %1293 = vmatpush1.msra.mxu0 0.0
    %1294 = vmatprep.subr.mxu0 0.0
    %1295 = vmatpush1.msra.mxu0 0.0
    %1296 = vmatprep.subr.mxu0 0.0
    %1297 = vmatpush1.msra.mxu0 0.0
    %1298 = vmatprep.subr.mxu0 0.0
    %1299 = vmatpush1.msra.mxu0 0.0
    %1300 = vmatprep.subr.mxu0 0.0
    %1301 = vmatpush1.msra.mxu0 0.0
    %1302 = vmatprep.subr.mxu0 0.0
    %v1303 = vand.u32 %v1245, 4294901760
    %1304 = vmatpush1.msra.mxu0 %v1303
    %1305 = vmatprep.subr.mxu0 0.0
    %v1306 = vand.u32 %v1244, 4294901760
    %1307 = vmatpush1.msra.mxu0 %v1306
    %1308 = vmatprep.subr.mxu0 0.0
    %v1309 = vand.u32 %v1243, 4294901760
    %1310 = vmatpush1.msra.mxu0 %v1309
    %1311 = vmatprep.subr.mxu0 0.0
    %v1312 = vand.u32 %v1242, 4294901760
    %1313 = vmatpush1.msra.mxu0 %v1312
    %1314 = vmatprep.subr.mxu0 0.0
    %v1315 = vand.u32 %v1241, 4294901760
    %1316 = vmatpush1.msra.mxu0 %v1315
    %1317 = vmatprep.subr.mxu0 0.0
    %v1318 = vand.u32 %v1240, 4294901760
    %1319 = vmatpush1.msra.mxu0 %v1318
    %1320 = vmatprep.subr.mxu0 0.0
    %v1321 = vand.u32 %v1239, 4294901760
    %1322 = vmatpush1.msra.mxu0 %v1321
    %1323 = vmatprep.subr.mxu0 0.0
    %v1324 = vand.u32 %v1238, 4294901760
    %1325 = vmatpush1.msra.mxu0 %v1324
    %1326 = vmatprep.subr.mxu0 0.0
    %1327 = vmatpush2.msra.mxu0 0.0
    %1328 = vmatprep.subr.mxu0 0.0
    %1329 = vmatpush2.msra.mxu0 0.0
    %1330 = vmatprep.subr.mxu0 0.0
    %1331 = vmatpush2.msra.mxu0 0.0
    %1332 = vmatprep.subr.mxu0 0.0
    %1333 = vmatpush2.msra.mxu0 0.0
    %1334 = vmatprep.subr.mxu0 0.0
    %1335 = vmatpush2.msra.mxu0 0.0
    %1336 = vmatprep.subr.mxu0 0.0
    %1337 = vmatpush2.msra.mxu0 0.0
    %1338 = vmatprep.subr.mxu0 0.0
    %1339 = vmatpush2.msra.mxu0 0.0
    %1340 = vmatprep.subr.mxu0 0.0
    %1341 = vmatpush2.msra.mxu0 0.0
    %1342 = vmatprep.subr.mxu0 0.0
    %1343 = vmatpush2.msra.mxu0 0.0
    %1344 = vmatprep.subr.mxu0 0.0
    %1345 = vmatpush2.msra.mxu0 0.0
    %1346 = vmatprep.subr.mxu0 0.0
    %1347 = vmatpush2.msra.mxu0 0.0
    %1348 = vmatprep.subr.mxu0 0.0
    %1349 = vmatpush2.msra.mxu0 0.0
    %1350 = vmatprep.subr.mxu0 0.0
    %1351 = vmatpush2.msra.mxu0 0.0
    %1352 = vmatprep.subr.mxu0 0.0
    %1353 = vmatpush2.msra.mxu0 0.0
    %1354 = vmatprep.subr.mxu0 0.0
    %1355 = vmatpush2.msra.mxu0 0.0
    %1356 = vmatprep.subr.mxu0 0.0
    %1357 = vmatpush2.msra.mxu0 0.0
    %1358 = vmatprep.mubr.f32.mxu0 0.0
    %v1359 = vand.u32 %v1275, 4294901760
    %v1360 = vsub.f32 %v1275, %v1359
    %v1361 = vand.u32 %v1360, 4294901760
    %v1362 = vsub.f32 %v1360, %v1361
    %v1363 = vand.u32 %v1362, 4294901760
    %1364 = vmatmul.mubr.f32.gmra.mxu0 %v1363
    %v1365 = vpop.f32.mrf.mxu0
    %v1366 = vadd.f32 %v1257, %v1365
    %v1367 = vpop.f32.mrf.mxu0
    %1368 = vmatprep.mubr.f32.mxu0 0.0
    %v1369 = vand.u32 %v1278, 4294901760
    %v1370 = vsub.f32 %v1278, %v1369
    %v1371 = vand.u32 %v1370, 4294901760
    %v1372 = vsub.f32 %v1370, %v1371
    %v1373 = vand.u32 %v1372, 4294901760
    %1374 = vmatmul.mubr.f32.gmra.mxu0 %v1373
    %v1375 = vpop.f32.mrf.mxu0
    %v1376 = vadd.f32 %v1262, %v1375
    %v1377 = vpop.f32.mrf.mxu0
    %1378 = vmatprep.mubr.f32.mxu0 0.0
    %v1379 = vand.u32 %v1281, 4294901760
    %v1380 = vsub.f32 %v1281, %v1379
    %v1381 = vand.u32 %v1380, 4294901760
    %v1382 = vsub.f32 %v1380, %v1381
    %v1383 = vand.u32 %v1382, 4294901760
    %1384 = vmatmul.mubr.f32.gmra.mxu0 %v1383
    %v1385 = vpop.f32.mrf.mxu0
    %v1386 = vadd.f32 %v1267, %v1385
    %v1387 = vpop.f32.mrf.mxu0
    %1388 = vmatprep.mubr.f32.mxu0 0.0
    %v1389 = vand.u32 %v1284, 4294901760
    %v1390 = vsub.f32 %v1284, %v1389
    %v1391 = vand.u32 %v1390, 4294901760
    %v1392 = vsub.f32 %v1390, %v1391
    %v1393 = vand.u32 %v1392, 4294901760
    %1394 = vmatmul.mubr.f32.gmra.mxu0 %v1393
    %v1395 = vpop.f32.mrf.mxu0
    %v1396 = vadd.f32 %v1272, %v1395
    %v1397 = vpop.f32.mrf.mxu0
    %1398 = vdwg.mxu0
    %1399 = vmatprep.subr.mxu0 0.0
    %1400 = vmatpush1.msra.mxu0 0.0
    %1401 = vmatprep.subr.mxu0 0.0
    %1402 = vmatpush1.msra.mxu0 0.0
    %1403 = vmatprep.subr.mxu0 0.0
    %1404 = vmatpush1.msra.mxu0 0.0
    %1405 = vmatprep.subr.mxu0 0.0
    %1406 = vmatpush1.msra.mxu0 0.0
    %1407 = vmatprep.subr.mxu0 0.0
    %1408 = vmatpush1.msra.mxu0 0.0
    %1409 = vmatprep.subr.mxu0 0.0
    %1410 = vmatpush1.msra.mxu0 0.0
    %1411 = vmatprep.subr.mxu0 0.0
    %1412 = vmatpush1.msra.mxu0 0.0
    %1413 = vmatprep.subr.mxu0 0.0
    %1414 = vmatpush1.msra.mxu0 0.0
    %1415 = vmatprep.subr.mxu0 0.0
    %v1416 = vand.u32 %v1245, 4294901760
    %v1417 = vsub.f32 %v1245, %v1416
    %v1418 = vand.u32 %v1417, 4294901760
    %v1419 = vsub.f32 %v1417, %v1418
    %v1420 = vand.u32 %v1419, 4294901760
    %1421 = vmatpush1.msra.mxu0 %v1420
    %1422 = vmatprep.subr.mxu0 0.0
    %v1423 = vand.u32 %v1244, 4294901760
    %v1424 = vsub.f32 %v1244, %v1423
    %v1425 = vand.u32 %v1424, 4294901760
    %v1426 = vsub.f32 %v1424, %v1425
    %v1427 = vand.u32 %v1426, 4294901760
    %1428 = vmatpush1.msra.mxu0 %v1427
    %1429 = vmatprep.subr.mxu0 0.0
    %v1430 = vand.u32 %v1243, 4294901760
    %v1431 = vsub.f32 %v1243, %v1430
    %v1432 = vand.u32 %v1431, 4294901760
    %v1433 = vsub.f32 %v1431, %v1432
    %v1434 = vand.u32 %v1433, 4294901760
    %1435 = vmatpush1.msra.mxu0 %v1434
    %1436 = vmatprep.subr.mxu0 0.0
    %v1437 = vand.u32 %v1242, 4294901760
    %v1438 = vsub.f32 %v1242, %v1437
    %v1439 = vand.u32 %v1438, 4294901760
    %v1440 = vsub.f32 %v1438, %v1439
    %v1441 = vand.u32 %v1440, 4294901760
    %1442 = vmatpush1.msra.mxu0 %v1441
    %1443 = vmatprep.subr.mxu0 0.0
    %v1444 = vand.u32 %v1241, 4294901760
    %v1445 = vsub.f32 %v1241, %v1444
    %v1446 = vand.u32 %v1445, 4294901760
    %v1447 = vsub.f32 %v1445, %v1446
    %v1448 = vand.u32 %v1447, 4294901760
    %1449 = vmatpush1.msra.mxu0 %v1448
    %1450 = vmatprep.subr.mxu0 0.0
    %v1451 = vand.u32 %v1240, 4294901760
    %v1452 = vsub.f32 %v1240, %v1451
    %v1453 = vand.u32 %v1452, 4294901760
    %v1454 = vsub.f32 %v1452, %v1453
    %v1455 = vand.u32 %v1454, 4294901760
    %1456 = vmatpush1.msra.mxu0 %v1455
    %1457 = vmatprep.subr.mxu0 0.0
    %v1458 = vand.u32 %v1239, 4294901760
    %v1459 = vsub.f32 %v1239, %v1458
    %v1460 = vand.u32 %v1459, 4294901760
    %v1461 = vsub.f32 %v1459, %v1460
    %v1462 = vand.u32 %v1461, 4294901760
    %1463 = vmatpush1.msra.mxu0 %v1462
    %1464 = vmatprep.subr.mxu0 0.0
    %v1465 = vand.u32 %v1238, 4294901760
    %v1466 = vsub.f32 %v1238, %v1465
    %v1467 = vand.u32 %v1466, 4294901760
    %v1468 = vsub.f32 %v1466, %v1467
    %v1469 = vand.u32 %v1468, 4294901760
    %1470 = vmatpush1.msra.mxu0 %v1469
    %1471 = vmatprep.subr.mxu0 0.0
    %1472 = vmatpush2.msra.mxu0 0.0
    %1473 = vmatprep.subr.mxu0 0.0
    %1474 = vmatpush2.msra.mxu0 0.0
    %1475 = vmatprep.subr.mxu0 0.0
    %1476 = vmatpush2.msra.mxu0 0.0
    %1477 = vmatprep.subr.mxu0 0.0
    %1478 = vmatpush2.msra.mxu0 0.0
    %1479 = vmatprep.subr.mxu0 0.0
    %1480 = vmatpush2.msra.mxu0 0.0
    %1481 = vmatprep.subr.mxu0 0.0
    %1482 = vmatpush2.msra.mxu0 0.0
    %1483 = vmatprep.subr.mxu0 0.0
    %1484 = vmatpush2.msra.mxu0 0.0
    %1485 = vmatprep.subr.mxu0 0.0
    %1486 = vmatpush2.msra.mxu0 0.0
    %1487 = vmatprep.subr.mxu0 0.0
    %1488 = vmatpush2.msra.mxu0 0.0
    %1489 = vmatprep.subr.mxu0 0.0
    %1490 = vmatpush2.msra.mxu0 0.0
    %1491 = vmatprep.subr.mxu0 0.0
    %1492 = vmatpush2.msra.mxu0 0.0
    %1493 = vmatprep.subr.mxu0 0.0
    %1494 = vmatpush2.msra.mxu0 0.0
    %1495 = vmatprep.subr.mxu0 0.0
    %1496 = vmatpush2.msra.mxu0 0.0
    %1497 = vmatprep.subr.mxu0 0.0
    %1498 = vmatpush2.msra.mxu0 0.0
    %1499 = vmatprep.subr.mxu0 0.0
    %1500 = vmatpush2.msra.mxu0 0.0
    %1501 = vmatprep.subr.mxu0 0.0
    %1502 = vmatpush2.msra.mxu0 0.0
    %1503 = vmatprep.mubr.f32.mxu0 0.0
    %v1504 = vand.u32 %v1275, 4294901760
    %1505 = vmatmul.mubr.f32.gmra.mxu0 %v1504
    %v1506 = vpop.f32.mrf.mxu0
    %v1507 = vadd.f32 %v1366, %v1506
    %v1508 = vpop.f32.mrf.mxu0
    %1509 = vmatprep.mubr.f32.mxu0 0.0
    %v1510 = vand.u32 %v1278, 4294901760
    %1511 = vmatmul.mubr.f32.gmra.mxu0 %v1510
    %v1512 = vpop.f32.mrf.mxu0
    %v1513 = vadd.f32 %v1376, %v1512
    %v1514 = vpop.f32.mrf.mxu0
    %1515 = vmatprep.mubr.f32.mxu0 0.0
    %v1516 = vand.u32 %v1281, 4294901760
    %1517 = vmatmul.mubr.f32.gmra.mxu0 %v1516
    %v1518 = vpop.f32.mrf.mxu0
    %v1519 = vadd.f32 %v1386, %v1518
    %v1520 = vpop.f32.mrf.mxu0
    %1521 = vmatprep.mubr.f32.mxu0 0.0
    %v1522 = vand.u32 %v1284, 4294901760
    %1523 = vmatmul.mubr.f32.gmra.mxu0 %v1522
    %v1524 = vpop.f32.mrf.mxu0
    %v1525 = vadd.f32 %v1396, %v1524
    %v1526 = vpop.f32.mrf.mxu0
    %1527 = vdwg.mxu0
    %1528 = vmatprep.subr.mxu0 0.0
    %1529 = vmatpush1.msra.mxu0 0.0
    %1530 = vmatprep.subr.mxu0 0.0
    %1531 = vmatpush1.msra.mxu0 0.0
    %1532 = vmatprep.subr.mxu0 0.0
    %1533 = vmatpush1.msra.mxu0 0.0
    %1534 = vmatprep.subr.mxu0 0.0
    %1535 = vmatpush1.msra.mxu0 0.0
    %1536 = vmatprep.subr.mxu0 0.0
    %1537 = vmatpush1.msra.mxu0 0.0
    %1538 = vmatprep.subr.mxu0 0.0
    %1539 = vmatpush1.msra.mxu0 0.0
    %1540 = vmatprep.subr.mxu0 0.0
    %1541 = vmatpush1.msra.mxu0 0.0
    %1542 = vmatprep.subr.mxu0 0.0
    %1543 = vmatpush1.msra.mxu0 0.0
    %1544 = vmatprep.subr.mxu0 0.0
    %v1545 = vand.u32 %v1245, 4294901760
    %v1546 = vsub.f32 %v1245, %v1545
    %1547 = vmatpush1.msra.mxu0 %v1546
    %1548 = vmatprep.subr.mxu0 0.0
    %v1549 = vand.u32 %v1244, 4294901760
    %v1550 = vsub.f32 %v1244, %v1549
    %1551 = vmatpush1.msra.mxu0 %v1550
    %1552 = vmatprep.subr.mxu0 0.0
    %v1553 = vand.u32 %v1243, 4294901760
    %v1554 = vsub.f32 %v1243, %v1553
    %1555 = vmatpush1.msra.mxu0 %v1554
    %1556 = vmatprep.subr.mxu0 0.0
    %v1557 = vand.u32 %v1242, 4294901760
    %v1558 = vsub.f32 %v1242, %v1557
    %1559 = vmatpush1.msra.mxu0 %v1558
    %1560 = vmatprep.subr.mxu0 0.0
    %v1561 = vand.u32 %v1241, 4294901760
    %v1562 = vsub.f32 %v1241, %v1561
    %1563 = vmatpush1.msra.mxu0 %v1562
    %1564 = vmatprep.subr.mxu0 0.0
    %v1565 = vand.u32 %v1240, 4294901760
    %v1566 = vsub.f32 %v1240, %v1565
    %1567 = vmatpush1.msra.mxu0 %v1566
    %1568 = vmatprep.subr.mxu0 0.0
    %v1569 = vand.u32 %v1239, 4294901760
    %v1570 = vsub.f32 %v1239, %v1569
    %1571 = vmatpush1.msra.mxu0 %v1570
    %1572 = vmatprep.subr.mxu0 0.0
    %v1573 = vand.u32 %v1238, 4294901760
    %v1574 = vsub.f32 %v1238, %v1573
    %1575 = vmatpush1.msra.mxu0 %v1574
    %1576 = vmatprep.subr.mxu0 0.0
    %1577 = vmatpush2.msra.mxu0 0.0
    %1578 = vmatprep.subr.mxu0 0.0
    %1579 = vmatpush2.msra.mxu0 0.0
    %1580 = vmatprep.subr.mxu0 0.0
    %1581 = vmatpush2.msra.mxu0 0.0
    %1582 = vmatprep.subr.mxu0 0.0
    %1583 = vmatpush2.msra.mxu0 0.0
    %1584 = vmatprep.subr.mxu0 0.0
    %1585 = vmatpush2.msra.mxu0 0.0
    %1586 = vmatprep.subr.mxu0 0.0
    %1587 = vmatpush2.msra.mxu0 0.0
    %1588 = vmatprep.subr.mxu0 0.0
    %1589 = vmatpush2.msra.mxu0 0.0
    %1590 = vmatprep.subr.mxu0 0.0
    %1591 = vmatpush2.msra.mxu0 0.0
    %1592 = vmatprep.subr.mxu0 0.0
    %1593 = vmatpush2.msra.mxu0 0.0
    %1594 = vmatprep.subr.mxu0 0.0
    %1595 = vmatpush2.msra.mxu0 0.0
    %1596 = vmatprep.subr.mxu0 0.0
    %1597 = vmatpush2.msra.mxu0 0.0
    %1598 = vmatprep.subr.mxu0 0.0
    %1599 = vmatpush2.msra.mxu0 0.0
    %1600 = vmatprep.subr.mxu0 0.0
    %1601 = vmatpush2.msra.mxu0 0.0
    %1602 = vmatprep.subr.mxu0 0.0
    %1603 = vmatpush2.msra.mxu0 0.0
    %1604 = vmatprep.subr.mxu0 0.0
    %1605 = vmatpush2.msra.mxu0 0.0
    %1606 = vmatprep.subr.mxu0 0.0
    %1607 = vmatpush2.msra.mxu0 0.0
    %1608 = vmatprep.mubr.f32.mxu0 0.0
    %v1609 = vand.u32 %v1275, 4294901760
    %v1610 = vsub.f32 %v1275, %v1609
    %1611 = vmatmul.mubr.f32.gmra.mxu0 %v1610
    %v1612 = vpop.f32.mrf.mxu0
    %v1613 = vadd.f32 %v1507, %v1612
    %v1614 = vpop.f32.mrf.mxu0
    %1615 = vmatprep.mubr.f32.mxu0 0.0
    %v1616 = vand.u32 %v1278, 4294901760
    %v1617 = vsub.f32 %v1278, %v1616
    %1618 = vmatmul.mubr.f32.gmra.mxu0 %v1617
    %v1619 = vpop.f32.mrf.mxu0
    %v1620 = vadd.f32 %v1513, %v1619
    %v1621 = vpop.f32.mrf.mxu0
    %1622 = vmatprep.mubr.f32.mxu0 0.0
    %v1623 = vand.u32 %v1281, 4294901760
    %v1624 = vsub.f32 %v1281, %v1623
    %1625 = vmatmul.mubr.f32.gmra.mxu0 %v1624
    %v1626 = vpop.f32.mrf.mxu0
    %v1627 = vadd.f32 %v1519, %v1626
    %v1628 = vpop.f32.mrf.mxu0
    %1629 = vmatprep.mubr.f32.mxu0 0.0
    %v1630 = vand.u32 %v1284, 4294901760
    %v1631 = vsub.f32 %v1284, %v1630
    %1632 = vmatmul.mubr.f32.gmra.mxu0 %v1631
    %v1633 = vpop.f32.mrf.mxu0
    %v1634 = vadd.f32 %v1525, %v1633
    %v1635 = vpop.f32.mrf.mxu0
    %1636 = vdwg.mxu0
    %1637 = vmatprep.subr.mxu0 0.0
    %1638 = vmatpush1.msra.mxu0 0.0
    %1639 = vmatprep.subr.mxu0 0.0
    %1640 = vmatpush1.msra.mxu0 0.0
    %1641 = vmatprep.subr.mxu0 0.0
    %1642 = vmatpush1.msra.mxu0 0.0
    %1643 = vmatprep.subr.mxu0 0.0
    %1644 = vmatpush1.msra.mxu0 0.0
    %1645 = vmatprep.subr.mxu0 0.0
    %1646 = vmatpush1.msra.mxu0 0.0
    %1647 = vmatprep.subr.mxu0 0.0
    %1648 = vmatpush1.msra.mxu0 0.0
    %1649 = vmatprep.subr.mxu0 0.0
    %1650 = vmatpush1.msra.mxu0 0.0
    %1651 = vmatprep.subr.mxu0 0.0
    %1652 = vmatpush1.msra.mxu0 0.0
    %1653 = vmatprep.subr.mxu0 0.0
    %v1654 = vand.u32 %v1245, 4294901760
    %1655 = vmatpush1.msra.mxu0 %v1654
    %1656 = vmatprep.subr.mxu0 0.0
    %v1657 = vand.u32 %v1244, 4294901760
    %1658 = vmatpush1.msra.mxu0 %v1657
    %1659 = vmatprep.subr.mxu0 0.0
    %v1660 = vand.u32 %v1243, 4294901760
    %1661 = vmatpush1.msra.mxu0 %v1660
    %1662 = vmatprep.subr.mxu0 0.0
    %v1663 = vand.u32 %v1242, 4294901760
    %1664 = vmatpush1.msra.mxu0 %v1663
    %1665 = vmatprep.subr.mxu0 0.0
    %v1666 = vand.u32 %v1241, 4294901760
    %1667 = vmatpush1.msra.mxu0 %v1666
    %1668 = vmatprep.subr.mxu0 0.0
    %v1669 = vand.u32 %v1240, 4294901760
    %1670 = vmatpush1.msra.mxu0 %v1669
    %1671 = vmatprep.subr.mxu0 0.0
    %v1672 = vand.u32 %v1239, 4294901760
    %1673 = vmatpush1.msra.mxu0 %v1672
    %1674 = vmatprep.subr.mxu0 0.0
    %v1675 = vand.u32 %v1238, 4294901760
    %1676 = vmatpush1.msra.mxu0 %v1675
    %1677 = vmatprep.subr.mxu0 0.0
    %1678 = vmatpush2.msra.mxu0 0.0
    %1679 = vmatprep.subr.mxu0 0.0
    %1680 = vmatpush2.msra.mxu0 0.0
    %1681 = vmatprep.subr.mxu0 0.0
    %1682 = vmatpush2.msra.mxu0 0.0
    %1683 = vmatprep.subr.mxu0 0.0
    %1684 = vmatpush2.msra.mxu0 0.0
    %1685 = vmatprep.subr.mxu0 0.0
    %1686 = vmatpush2.msra.mxu0 0.0
    %1687 = vmatprep.subr.mxu0 0.0
    %1688 = vmatpush2.msra.mxu0 0.0
    %1689 = vmatprep.subr.mxu0 0.0
    %1690 = vmatpush2.msra.mxu0 0.0
    %1691 = vmatprep.subr.mxu0 0.0
    %1692 = vmatpush2.msra.mxu0 0.0
    %1693 = vmatprep.subr.mxu0 0.0
    %1694 = vmatpush2.msra.mxu0 0.0
    %1695 = vmatprep.subr.mxu0 0.0
    %1696 = vmatpush2.msra.mxu0 0.0
    %1697 = vmatprep.subr.mxu0 0.0
    %1698 = vmatpush2.msra.mxu0 0.0
    %1699 = vmatprep.subr.mxu0 0.0
    %1700 = vmatpush2.msra.mxu0 0.0
    %1701 = vmatprep.subr.mxu0 0.0
    %1702 = vmatpush2.msra.mxu0 0.0
    %1703 = vmatprep.subr.mxu0 0.0
    %1704 = vmatpush2.msra.mxu0 0.0
    %1705 = vmatprep.subr.mxu0 0.0
    %1706 = vmatpush2.msra.mxu0 0.0
    %1707 = vmatprep.subr.mxu0 0.0
    %1708 = vmatpush2.msra.mxu0 0.0
    %1709 = vmatprep.mubr.f32.mxu0 0.0
    %v1710 = vand.u32 %v1275, 4294901760
    %v1711 = vsub.f32 %v1275, %v1710
    %v1712 = vand.u32 %v1711, 4294901760
    %1713 = vmatmul.mubr.f32.gmra.mxu0 %v1712
    %v1714 = vpop.f32.mrf.mxu0
    %v1715 = vadd.f32 %v1613, %v1714
    %v1716 = vpop.f32.mrf.mxu0
    %1717 = vmatprep.mubr.f32.mxu0 0.0
    %v1718 = vand.u32 %v1278, 4294901760
    %v1719 = vsub.f32 %v1278, %v1718
    %v1720 = vand.u32 %v1719, 4294901760
    %1721 = vmatmul.mubr.f32.gmra.mxu0 %v1720
    %v1722 = vpop.f32.mrf.mxu0
    %v1723 = vadd.f32 %v1620, %v1722
    %v1724 = vpop.f32.mrf.mxu0
    %1725 = vmatprep.mubr.f32.mxu0 0.0
    %v1726 = vand.u32 %v1281, 4294901760
    %v1727 = vsub.f32 %v1281, %v1726
    %v1728 = vand.u32 %v1727, 4294901760
    %1729 = vmatmul.mubr.f32.gmra.mxu0 %v1728
    %v1730 = vpop.f32.mrf.mxu0
    %v1731 = vadd.f32 %v1627, %v1730
    %v1732 = vpop.f32.mrf.mxu0
    %1733 = vmatprep.mubr.f32.mxu0 0.0
    %v1734 = vand.u32 %v1284, 4294901760
    %v1735 = vsub.f32 %v1284, %v1734
    %v1736 = vand.u32 %v1735, 4294901760
    %1737 = vmatmul.mubr.f32.gmra.mxu0 %v1736
    %v1738 = vpop.f32.mrf.mxu0
    %v1739 = vadd.f32 %v1634, %v1738
    %v1740 = vpop.f32.mrf.mxu0
    %1741 = vdwg.mxu0
    %1742 = vmatprep.subr.mxu0 0.0
    %1743 = vmatpush1.msra.mxu0 0.0
    %1744 = vmatprep.subr.mxu0 0.0
    %1745 = vmatpush1.msra.mxu0 0.0
    %1746 = vmatprep.subr.mxu0 0.0
    %1747 = vmatpush1.msra.mxu0 0.0
    %1748 = vmatprep.subr.mxu0 0.0
    %1749 = vmatpush1.msra.mxu0 0.0
    %1750 = vmatprep.subr.mxu0 0.0
    %1751 = vmatpush1.msra.mxu0 0.0
    %1752 = vmatprep.subr.mxu0 0.0
    %1753 = vmatpush1.msra.mxu0 0.0
    %1754 = vmatprep.subr.mxu0 0.0
    %1755 = vmatpush1.msra.mxu0 0.0
    %1756 = vmatprep.subr.mxu0 0.0
    %1757 = vmatpush1.msra.mxu0 0.0
    %1758 = vmatprep.subr.mxu0 0.0
    %v1759 = vand.u32 %v1245, 4294901760
    %v1760 = vsub.f32 %v1245, %v1759
    %v1761 = vand.u32 %v1760, 4294901760
    %1762 = vmatpush1.msra.mxu0 %v1761
    %1763 = vmatprep.subr.mxu0 0.0
    %v1764 = vand.u32 %v1244, 4294901760
    %v1765 = vsub.f32 %v1244, %v1764
    %v1766 = vand.u32 %v1765, 4294901760
    %1767 = vmatpush1.msra.mxu0 %v1766
    %1768 = vmatprep.subr.mxu0 0.0
    %v1769 = vand.u32 %v1243, 4294901760
    %v1770 = vsub.f32 %v1243, %v1769
    %v1771 = vand.u32 %v1770, 4294901760
    %1772 = vmatpush1.msra.mxu0 %v1771
    %1773 = vmatprep.subr.mxu0 0.0
    %v1774 = vand.u32 %v1242, 4294901760
    %v1775 = vsub.f32 %v1242, %v1774
    %v1776 = vand.u32 %v1775, 4294901760
    %1777 = vmatpush1.msra.mxu0 %v1776
    %1778 = vmatprep.subr.mxu0 0.0
    %v1779 = vand.u32 %v1241, 4294901760
    %v1780 = vsub.f32 %v1241, %v1779
    %v1781 = vand.u32 %v1780, 4294901760
    %1782 = vmatpush1.msra.mxu0 %v1781
    %1783 = vmatprep.subr.mxu0 0.0
    %v1784 = vand.u32 %v1240, 4294901760
    %v1785 = vsub.f32 %v1240, %v1784
    %v1786 = vand.u32 %v1785, 4294901760
    %1787 = vmatpush1.msra.mxu0 %v1786
    %1788 = vmatprep.subr.mxu0 0.0
    %v1789 = vand.u32 %v1239, 4294901760
    %v1790 = vsub.f32 %v1239, %v1789
    %v1791 = vand.u32 %v1790, 4294901760
    %1792 = vmatpush1.msra.mxu0 %v1791
    %1793 = vmatprep.subr.mxu0 0.0
    %v1794 = vand.u32 %v1238, 4294901760
    %v1795 = vsub.f32 %v1238, %v1794
    %v1796 = vand.u32 %v1795, 4294901760
    %1797 = vmatpush1.msra.mxu0 %v1796
    %1798 = vmatprep.subr.mxu0 0.0
    %1799 = vmatpush2.msra.mxu0 0.0
    %1800 = vmatprep.subr.mxu0 0.0
    %1801 = vmatpush2.msra.mxu0 0.0
    %1802 = vmatprep.subr.mxu0 0.0
    %1803 = vmatpush2.msra.mxu0 0.0
    %1804 = vmatprep.subr.mxu0 0.0
    %1805 = vmatpush2.msra.mxu0 0.0
    %1806 = vmatprep.subr.mxu0 0.0
    %1807 = vmatpush2.msra.mxu0 0.0
    %1808 = vmatprep.subr.mxu0 0.0
    %1809 = vmatpush2.msra.mxu0 0.0
    %1810 = vmatprep.subr.mxu0 0.0
    %1811 = vmatpush2.msra.mxu0 0.0
    %1812 = vmatprep.subr.mxu0 0.0
    %1813 = vmatpush2.msra.mxu0 0.0
    %1814 = vmatprep.subr.mxu0 0.0
    %1815 = vmatpush2.msra.mxu0 0.0
    %1816 = vmatprep.subr.mxu0 0.0
    %1817 = vmatpush2.msra.mxu0 0.0
    %1818 = vmatprep.subr.mxu0 0.0
    %1819 = vmatpush2.msra.mxu0 0.0
    %1820 = vmatprep.subr.mxu0 0.0
    %1821 = vmatpush2.msra.mxu0 0.0
    %1822 = vmatprep.subr.mxu0 0.0
    %1823 = vmatpush2.msra.mxu0 0.0
    %1824 = vmatprep.subr.mxu0 0.0
    %1825 = vmatpush2.msra.mxu0 0.0
    %1826 = vmatprep.subr.mxu0 0.0
    %1827 = vmatpush2.msra.mxu0 0.0
    %1828 = vmatprep.subr.mxu0 0.0
    %1829 = vmatpush2.msra.mxu0 0.0
    %1830 = vmatprep.mubr.f32.mxu0 0.0
    %v1831 = vand.u32 %v1275, 4294901760
    %1832 = vmatmul.mubr.f32.gmra.mxu0 %v1831
    %v1833 = vpop.f32.mrf.mxu0
    %v1834 = vadd.f32 %v1715, %v1833
    %v1835 = vpop.f32.mrf.mxu0
    %1836 = vmatprep.mubr.f32.mxu0 0.0
    %v1837 = vand.u32 %v1278, 4294901760
    %1838 = vmatmul.mubr.f32.gmra.mxu0 %v1837
    %v1839 = vpop.f32.mrf.mxu0
    %v1840 = vadd.f32 %v1723, %v1839
    %v1841 = vpop.f32.mrf.mxu0
    %1842 = vmatprep.mubr.f32.mxu0 0.0
    %v1843 = vand.u32 %v1281, 4294901760
    %1844 = vmatmul.mubr.f32.gmra.mxu0 %v1843
    %v1845 = vpop.f32.mrf.mxu0
    %v1846 = vadd.f32 %v1731, %v1845
    %v1847 = vpop.f32.mrf.mxu0
    %1848 = vmatprep.mubr.f32.mxu0 0.0
    %v1849 = vand.u32 %v1284, 4294901760
    %1850 = vmatmul.mubr.f32.gmra.mxu0 %v1849
    %v1851 = vpop.f32.mrf.mxu0
    %v1852 = vadd.f32 %v1739, %v1851
    %v1853 = vpop.f32.mrf.mxu0
    %1854 = vdwg.mxu0
    %1855 = vmatprep.subr.mxu0 0.0
    %1856 = vmatpush1.msra.mxu0 0.0
    %1857 = vmatprep.subr.mxu0 0.0
    %1858 = vmatpush1.msra.mxu0 0.0
    %1859 = vmatprep.subr.mxu0 0.0
    %1860 = vmatpush1.msra.mxu0 0.0
    %1861 = vmatprep.subr.mxu0 0.0
    %1862 = vmatpush1.msra.mxu0 0.0
    %1863 = vmatprep.subr.mxu0 0.0
    %1864 = vmatpush1.msra.mxu0 0.0
    %1865 = vmatprep.subr.mxu0 0.0
    %1866 = vmatpush1.msra.mxu0 0.0
    %1867 = vmatprep.subr.mxu0 0.0
    %1868 = vmatpush1.msra.mxu0 0.0
    %1869 = vmatprep.subr.mxu0 0.0
    %1870 = vmatpush1.msra.mxu0 0.0
    %1871 = vmatprep.subr.mxu0 0.0
    %v1872 = vand.u32 %v1245, 4294901760
    %1873 = vmatpush1.msra.mxu0 %v1872
    %1874 = vmatprep.subr.mxu0 0.0
    %v1875 = vand.u32 %v1244, 4294901760
    %1876 = vmatpush1.msra.mxu0 %v1875
    %1877 = vmatprep.subr.mxu0 0.0
    %v1878 = vand.u32 %v1243, 4294901760
    %1879 = vmatpush1.msra.mxu0 %v1878
    %1880 = vmatprep.subr.mxu0 0.0
    %v1881 = vand.u32 %v1242, 4294901760
    %1882 = vmatpush1.msra.mxu0 %v1881
    %1883 = vmatprep.subr.mxu0 0.0
    %v1884 = vand.u32 %v1241, 4294901760
    %1885 = vmatpush1.msra.mxu0 %v1884
    %1886 = vmatprep.subr.mxu0 0.0
    %v1887 = vand.u32 %v1240, 4294901760
    %1888 = vmatpush1.msra.mxu0 %v1887
    %1889 = vmatprep.subr.mxu0 0.0
    %v1890 = vand.u32 %v1239, 4294901760
    %1891 = vmatpush1.msra.mxu0 %v1890
    %1892 = vmatprep.subr.mxu0 0.0
    %v1893 = vand.u32 %v1238, 4294901760
    %1894 = vmatpush1.msra.mxu0 %v1893
    %1895 = vmatprep.subr.mxu0 0.0
    %1896 = vmatpush2.msra.mxu0 0.0
    %1897 = vmatprep.subr.mxu0 0.0
    %1898 = vmatpush2.msra.mxu0 0.0
    %1899 = vmatprep.subr.mxu0 0.0
    %1900 = vmatpush2.msra.mxu0 0.0
    %1901 = vmatprep.subr.mxu0 0.0
    %1902 = vmatpush2.msra.mxu0 0.0
    %1903 = vmatprep.subr.mxu0 0.0
    %1904 = vmatpush2.msra.mxu0 0.0
    %1905 = vmatprep.subr.mxu0 0.0
    %1906 = vmatpush2.msra.mxu0 0.0
    %1907 = vmatprep.subr.mxu0 0.0
    %1908 = vmatpush2.msra.mxu0 0.0
    %1909 = vmatprep.subr.mxu0 0.0
    %1910 = vmatpush2.msra.mxu0 0.0
    %1911 = vmatprep.subr.mxu0 0.0
    %1912 = vmatpush2.msra.mxu0 0.0
    %1913 = vmatprep.subr.mxu0 0.0
    %1914 = vmatpush2.msra.mxu0 0.0
    %1915 = vmatprep.subr.mxu0 0.0
    %1916 = vmatpush2.msra.mxu0 0.0
    %1917 = vmatprep.subr.mxu0 0.0
    %1918 = vmatpush2.msra.mxu0 0.0
    %1919 = vmatprep.subr.mxu0 0.0
    %1920 = vmatpush2.msra.mxu0 0.0
    %1921 = vmatprep.subr.mxu0 0.0
    %1922 = vmatpush2.msra.mxu0 0.0
    %1923 = vmatprep.subr.mxu0 0.0
    %1924 = vmatpush2.msra.mxu0 0.0
    %1925 = vmatprep.subr.mxu0 0.0
    %1926 = vmatpush2.msra.mxu0 0.0
    %1927 = vmatprep.mubr.f32.mxu0 0.0
    %v1928 = vand.u32 %v1275, 4294901760
    %1929 = vmatmul.mubr.f32.gmra.mxu0 %v1928
    %v1930 = vpop.f32.mrf.mxu0
    %v1931 = vadd.f32 %v1834, %v1930
    %v1932 = vpop.f32.mrf.mxu0
    %1933 = vmatprep.mubr.f32.mxu0 0.0
    %v1934 = vand.u32 %v1278, 4294901760
    %1935 = vmatmul.mubr.f32.gmra.mxu0 %v1934
    %v1936 = vpop.f32.mrf.mxu0
    %v1937 = vadd.f32 %v1840, %v1936
    %v1938 = vpop.f32.mrf.mxu0
    %1939 = vmatprep.mubr.f32.mxu0 0.0
    %v1940 = vand.u32 %v1281, 4294901760
    %1941 = vmatmul.mubr.f32.gmra.mxu0 %v1940
    %v1942 = vpop.f32.mrf.mxu0
    %v1943 = vadd.f32 %v1846, %v1942
    %v1944 = vpop.f32.mrf.mxu0
    %1945 = vmatprep.mubr.f32.mxu0 0.0
    %v1946 = vand.u32 %v1284, 4294901760
    %1947 = vmatmul.mubr.f32.gmra.mxu0 %v1946
    %v1948 = vpop.f32.mrf.mxu0
    %v1949 = vadd.f32 %v1852, %v1948
    %v1950 = vpop.f32.mrf.mxu0
    %1951 = vdwg.mxu0
    %v1952 = vtanh.pop %v1931
    %v1953 = vtanh.pop %v1937
    %v1954 = vtanh.pop %v1943
    %v1955 = vtanh.pop %v1949
    %v1956 = vld [vmem:[%s7] sm:$0xff]
    %v1957 = vld [vmem:[%s7 + $0x8] sm:$0xff]
    %v1958 = vld [vmem:[%s7 + $0x10] sm:$0xff]
    %v1959 = vld [vmem:[%s7 + $0x18] sm:$0xff]
    %1961 = vset.pattern.permute.xlu0 0
    %1962 = vperm.xlu0 %1961, %v1956
    %v1963 = vpop.permute.xlu0 %1962
    %1966 = vset.pattern.permute.xlu0 0
    %1967 = vperm.xlu0 %1966, %v1957
    %v1968 = vpop.permute.xlu0 %1967
    %1971 = vset.pattern.permute.xlu0 0
    %1972 = vperm.xlu0 %1971, %v1958
    %v1973 = vpop.permute.xlu0 %1972
    %1976 = vset.pattern.permute.xlu0 0
    %1977 = vperm.xlu0 %1976, %v1959
    %v1978 = vpop.permute.xlu0 %1977
    %v1980 = vmul.f32 %v1963, %v1952
    %v1981 = vmul.f32 %v1968, %v1953
    %v1982 = vmul.f32 %v1973, %v1954
    %v1983 = vmul.f32 %v1978, %v1955
    %v1984 = vadd.f32 %v1980, %v1981
    %v1985 = vadd.f32 %v1984, %v1982
    %v1986 = vadd.f32 %v1985, %v1983
    %v1987 = vrot.slane %v1986, 4
    %v1988 = vadd.f32 %v1986, %v1987
    %v1989 = vrot.slane %v1988, 2
    %v1990 = vadd.f32 %v1988, %v1989
    %v1991 = vrot.slane %v1990, 1
    %v1992 = vadd.f32 %v1990, %v1991
    %v1993 = vld [vmem:[#allocation2] sm:$0x1]
    %1995 = vset.pattern.permute.xlu0 0
    %1996 = vperm.xlu0 %1995, %v1993
    %v1997 = vpop.permute.xlu0 %1996
    %v1999 = vlaneseq
    %v2000 = vshrl.u32 %v1999, 7
    %v2001 = vsub.s32 0, %v2000
    %v2002 = vrot.slane %v1997, %v2001
    %v2003 = vadd.f32 %v1992, %v2002
    %2004 = vst [vmem:[#allocation3] sm:$0x1] %v2003
    %v2005 = vlaneseq
    %v2006 = vand.u32 %v2005, 127
    %s2007 = smul.u32 0, 128
    %v2008 = vstv %s2007
    %v2009 = vadd.s32 %v2008, %v2006
    %vm2010 = vcmp.lt.s32.totalorder %v2009, 8
    %v2011 = vsel %vm2010, 1, 0
    %v2012 = vcvt.s32.f32 %v2011
    %vm2013 = vcmp.eq.f32.partialorder %v2003, %v2003
    %v2014 = vand.u32 2147483647, %v2003
    %vm2015 = vcmp.lt.f32.partialorder %v2014, inf
    %vm2016 = vmand %vm2013, %vm2015
    %v2017 = vsel %vm2016, 1, 0
    %v2018 = vcvt.s32.f32 %v2017
    %v2019 = vmul.f32 %v2018, %v2012
    %vm2020 = vcmask 1040384
    %v2021 = vsel %vm2020, %v2019, 0.0
    %2022 = vadd.xlane.f32.xlu0 %v2021
    %v2023 = vpop.xlane.xlu0 %2022
    %v2024 = vrot.slane %v2023, 4
    %v2025 = vadd.f32 %v2023, %v2024
    %v2026 = vrot.slane %v2025, 2
    %v2027 = vadd.f32 %v2025, %v2026
    %v2028 = vrot.slane %v2027, 1
    %v2029 = vadd.f32 %v2027, %v2028
    %s2030 = vtos %v2029
    %vm2031 = vcmp.ge.f32.partialorder %v38, 0.0
    %v2032 = vsel %vm2031, 1, 0
    %v2033 = vcvt.s32.f32 %v2032
    %v2034 = vmul.f32 %v2033, %v2012
    %v2035 = vsel %vm2020, %v2034, 0.0
    %2036 = vadd.xlane.f32.xlu0 %v2035
    %v2037 = vpop.xlane.xlu0 %2036
    %v2038 = vrot.slane %v2037, 4
    %v2039 = vadd.f32 %v2037, %v2038
    %v2040 = vrot.slane %v2039, 2
    %v2041 = vadd.f32 %v2039, %v2040
    %v2042 = vrot.slane %v2041, 1
    %v2043 = vadd.f32 %v2041, %v2042
    %s2044 = vtos %v2043
    %2045 = vrot.lane.b32.xlu0 %v2003, 127
    %v2046 = vpop.permute.xlu0 %2045
    %vm2047 = vcmp.lt.s32.totalorder %v2006, 127
    %v2048 = vadd.s32 %v2009, 1
    %vm2049 = vcmp.lt.s32.totalorder %v2048, 8
    %vm2050 = vmand %vm2047, %vm2049
    %v2051 = vsel %vm2050, 1, 0
    %v2052 = vcvt.s32.f32 %v2051
    %v2053 = vsub.f32 %v2046, %v2003
    %v2054 = vand.u32 2147483647, %v2053
    %v2055 = vmul.f32 %v2054, %v2052
    %v2056 = vsel %vm2020, %v2055, 0.0
    %2057 = vadd.xlane.f32.xlu0 %v2056
    %v2058 = vpop.xlane.xlu0 %2057
    %v2059 = vrot.slane %v2058, 4
    %v2060 = vadd.f32 %v2058, %v2059
    %v2061 = vrot.slane %v2060, 2
    %v2062 = vadd.f32 %v2060, %v2061
    %v2063 = vrot.slane %v2062, 1
    %v2064 = vadd.f32 %v2062, %v2063
    %s2065 = vtos %v2064
    %vm2066 = vcmp.eq.s32.totalorder %v2006, 0
    %v2067 = vsel %vm2066, 1, 0
    %v2068 = vcvt.s32.f32 %v2067
    %v2069 = vstv %s2030
    %v2070 = vmul.f32 %v2068, %v2069
    %vm2071 = vcmp.eq.s32.totalorder %v2006, 1
    %v2072 = vsel %vm2071, 1, 0
    %v2073 = vcvt.s32.f32 %v2072
    %v2074 = vstv %s2044
    %v2075 = vmul.f32 %v2073, %v2074
    %v2076 = vadd.f32 %v2070, %v2075
    %vm2077 = vcmp.eq.s32.totalorder %v2006, 2
    %v2078 = vsel %vm2077, 1, 0
    %v2079 = vcvt.s32.f32 %v2078
    %v2080 = vstv %s2065
    %v2081 = vmul.f32 %v2079, %v2080
    %v2082 = vadd.f32 %v2076, %v2081
    %2083 = vst [vmem:[#allocation5] sm:$0x1] %v2082
    // Predicated region
    $region38: #{tpu_custom_call.1} parent=1 // pred_check
      _
    $region39: #{tpu_custom_call.1} parent=1 // pred_check_branch
      %2085 = sbr.rel (0) target = $region41
    $region40: #{tpu_custom_call.1} parent=1 // pred_region
      %s2087 = ssub.s32 16, 16
      %2088 = vsyncadd [#allocation4], %s2087
      %s2090 = sshll.u32 [#allocation3], 4
      %s2091 = int_to_ptr.vmem [resolvable:$true] %s2090
      %2093 = dma.vmem_to_hbm [thread:$0]  %s2091, 16, %s9, [#allocation4]
    $region41: #{tpu_custom_call.1} parent=1 // pred_fallthru
      _
    // Predicated region
    $region42: #{tpu_custom_call.1} parent=1 // pred_check
      _
    $region43: #{tpu_custom_call.1} parent=1 // pred_check_branch
      %2095 = sbr.rel (0) target = $region45
    $region44: #{tpu_custom_call.1} parent=1 // pred_region
      %s2097 = ssub.s32 16, 16
      %2098 = vsyncadd [#allocation6], %s2097
      %s2100 = sshll.u32 [#allocation5], 4
      %s2101 = int_to_ptr.vmem [resolvable:$true] %s2100
      %2103 = dma.vmem_to_hbm [thread:$0]  %s2101, 16, %s10, [#allocation6]
    $region45: #{tpu_custom_call.1} parent=1 // pred_fallthru
      _
    // Predicated region
    $region46: #{tpu_custom_call.1} parent=1 // pred_check
      _
    $region47: #{tpu_custom_call.1} parent=1 // pred_check_branch
      %2105 = sbr.rel (0) target = $region49
    $region48: #{tpu_custom_call.1} parent=1 // pred_region
      %2106 = dma.done [#allocation4], 16
    $region49: #{tpu_custom_call.1} parent=1 // pred_fallthru
      _
    // Predicated region
    $region50: #{tpu_custom_call.1} parent=1 // pred_check
      _
    $region51: #{tpu_custom_call.1} parent=1 // pred_check_branch
      %2108 = sbr.rel (0) target = $region53
    $region52: #{tpu_custom_call.1} parent=1 // pred_region
      %2109 = dma.done [#allocation6], 16
    $region53: #{tpu_custom_call.1} parent=1 // pred_fallthru
      _
    %2110 = vsyncpa [#allocation4], 1
    %2111 = vsyncpa [#allocation6], 1

</llo_original>
